<compile_context>
chip_gen: v7x
topology: tpu7x:2x2x1
jax: 0.10.0
libtpu: 0.0.40
codegen_flags: <defaults>
</compile_context>

<pallas_src>
import functools

import numpy as np
import jax
import jax.numpy as jnp
from jax.experimental import pallas as pl
from jax.experimental.pallas import tpu as pltpu

EPS = 1e-5
LANE = 128
HALO = 8                        # sublane-aligned halo per side (k=3 needs >=1; 8 keeps slices aligned)
DEFAULT_ROW_TILE = 1024         # v7x-safe (64 MiB VMEM); v5e/v6e can use 2048-4096
VMEM_LIMIT = 48 * 1024 * 1024   # explicit scoped-VMEM limit, below v7x's 64 MiB physical


def _round_up(n, m):
    return ((n + m - 1) // m) * m


def _pad_last(a, width):
    pad = width - a.shape[-1]
    if pad <= 0:
        return a
    return jnp.pad(a, [(0, 0)] * (a.ndim - 1) + [(0, pad)])


# --------------------------------- kernels -----------------------------------
def _row_masks(tile, tr, trh, lout, r, par_off):
    """Per-row metadata computed in-kernel from an iota (no (R,1) HBM inputs).

    The sequence index is derived with exact f32 floor-division (row counts < 2^22),
    which stays on plain VPU ops (mul / floor / casts).
    """
    loc = jax.lax.broadcasted_iota(jnp.int32, (trh, 1), 0)
    g = tile * tr + loc - HALO                                   # global output-row index
    gf = g.astype(jnp.float32)
    seq = jnp.floor((gf + 0.5) * (1.0 / lout)).astype(jnp.int32)  # batch (sequence) index
    p = g - seq * lout                                           # position within sequence
    mprev = p != 0                                               # row j-1 exists in-sequence
    mnext = p != (lout - 1)                                      # row j+1 exists in-sequence
    par = ((p + par_off) & 1) == 1                               # upconv output-position parity
    core = (loc >= HALO) & (loc < HALO + tr) & (g >= 0) & (g < r)
    return par, mprev, mnext, core


def _conv3_taps(h, mprev, mnext):
    """k=3 / pad=1 neighbour taps via sublane rolls (XLU) + boundary masks."""
    n = h.shape[0]
    zero = jnp.zeros((), h.dtype)
    hm1 = jnp.where(mprev, pltpu.roll(h, 1, 0), zero)            # row j <- row j-1
    hp1 = jnp.where(mnext, pltpu.roll(h, n - 1, 0), zero)        # row j <- row j+1
    return hm1, hp1


def _stage1_kernel(xup_ref, skip_ref, wup_ref, bup_ref, w1u_ref, w1s_ref,
                   z1_ref, st_ref, *, tr, trh, lout, r, cout_p, par_off, mm_dtype):
    i = pl.program_id(0)
    par, mprev, mnext, core = _row_masks(i, tr, trh, lout, r, par_off)

    # ConvTranspose1d(k=2, s=2), evaluated at output rows: one stacked matmul
    # (fills the 256-wide MXU on v6e/v7x) + a single parity select.
    xup = xup_ref[0]                                             # (trh, Cin_p)
    y = jnp.dot(xup, wup_ref[...], preferred_element_type=jnp.float32)
    up = jnp.where(par, y[:, cout_p:], y[:, :cout_p]) + bup_ref[...]
    up = up.astype(mm_dtype)

    # Conv1d #1 (k=3, pad=1) over the [up | skip] channels WITHOUT materializing
    # the concat: six accumulating MXU matmuls (K=128 each).  Bias b1 is dropped
    # (exactly cancelled by the following training-mode BatchNorm).
    skp = skip_ref[0]                                            # (trh, Cskip_p)
    um1, up1 = _conv3_taps(up, mprev, mnext)
    sm1, sp1 = _conv3_taps(skp, mprev, mnext)
    z1 = jnp.dot(um1, w1u_ref[0], preferred_element_type=jnp.float32)
    z1 += jnp.dot(up,  w1u_ref[1], preferred_element_type=jnp.float32)
    z1 += jnp.dot(up1, w1u_ref[2], preferred_element_type=jnp.float32)
    z1 += jnp.dot(sm1, w1s_ref[0], preferred_element_type=jnp.float32)
    z1 += jnp.dot(skp, w1s_ref[1], preferred_element_type=jnp.float32)
    z1 += jnp.dot(sp1, w1s_ref[2], preferred_element_type=jnp.float32)

    z1_ref[0] = z1.astype(z1_ref.dtype)                          # halo'd tile write-back

    # BatchNorm #1 statistics: single sweep (sum & sum-of-squares) over the rows
    # owned by this tile, accumulated across the 'arbitrary' grid axis.
    zc = jnp.where(core, z1, 0.0)
    sums = jnp.concatenate([jnp.sum(zc, axis=0, keepdims=True),
                            jnp.sum(zc * zc, axis=0, keepdims=True)], axis=0)

    @pl.when(i == 0)
    def _():
        st_ref[...] = jnp.zeros_like(st_ref)
    st_ref[...] += sums


def _stage2_kernel(z1_ref, sc1_ref, sh1_ref, w2_ref, z2_ref, st_ref,
                   *, tr, trh, lout, r, mm_dtype):
    i = pl.program_id(0)
    _, mprev, mnext, core = _row_masks(i, tr, trh, lout, r, 0)

    # BatchNorm #1 (folded scale/shift) + ReLU, pointwise on the halo'd tile.
    h1 = jnp.maximum(z1_ref[0].astype(jnp.float32) * sc1_ref[...] + sh1_ref[...], 0.0)
    h1 = h1.astype(mm_dtype)

    # Conv1d #2 (k=3, pad=1): rolls + three accumulating MXU matmuls (b2 dropped).
    hm1, hp1 = _conv3_taps(h1, mprev, mnext)
    z2 = jnp.dot(hm1, w2_ref[0], preferred_element_type=jnp.float32)
    z2 += jnp.dot(h1,  w2_ref[1], preferred_element_type=jnp.float32)
    z2 += jnp.dot(hp1, w2_ref[2], preferred_element_type=jnp.float32)

    z2_ref[...] = z2[HALO:HALO + tr].astype(z2_ref.dtype)        # sublane-aligned core slice

    zc = jnp.where(core, z2, 0.0)
    sums = jnp.concatenate([jnp.sum(zc, axis=0, keepdims=True),
                            jnp.sum(zc * zc, axis=0, keepdims=True)], axis=0)

    @pl.when(i == 0)
    def _():
        st_ref[...] = jnp.zeros_like(st_ref)
    st_ref[...] += sums


def _stage3_kernel(z2_ref, sc2_ref, sh2_ref, o_ref):
    # BatchNorm #2 (folded) + ReLU: pointwise apply pass ('parallel' row axis).
    z2 = z2_ref[...].astype(jnp.float32)
    o_ref[...] = jnp.maximum(z2 * sc2_ref[...] + sh2_ref[...], 0.0)


# --------------------------------- wrapper ------------------------------------
def _bn_scale_shift(stats, gamma_p, beta_p, count):
    """Fold training-mode BN (batch stats, biased var) into per-channel scale/shift."""
    mu = stats[0:1] / count
    var = jnp.maximum(stats[1:2] / count - mu * mu, 0.0)
    scale = gamma_p * jax.lax.rsqrt(var + EPS)
    shift = beta_p - mu * scale
    return scale, shift


def decoder_block(x, skip, params, *, mm_dtype=jnp.bfloat16, row_tile=DEFAULT_ROW_TILE):
    """x: (N, Cin, L), skip: (N, Cskip, Ls) in PyTorch NCL.  Returns (N, Cout, Lout)."""
    N, Cin, L = x.shape
    _, Cskip, Ls = skip.shape
    Cout = params["bup"].shape[0]
    Lup = 2 * L
    diff = Ls - Lup

    # replicate the PyTorch cropping logic (static shapes -> Python glue)
    kept = list(range(Lup))
    if diff > 0:
        skip = skip[:, :, diff // 2: -(diff - diff // 2)]
    elif diff < 0:
        kept = kept[-diff // 2: diff - diff // 2]
    Lout = len(kept)
    assert skip.shape[2] == Lout, "length mismatch after crop (mirrors torch.cat error)"
    assert params["w1"].shape[1] == Cout + Cskip
    s0 = kept[0]                                    # first kept upconv output position
    R = N * Lout

    Cin_p, Cout_p, Cskip_p = (_round_up(c, LANE) for c in (Cin, Cout, Cskip))

    # Row tiling (pipelined grid).  TODO(synk): pick per generation at runtime.
    TR = max(8, min(_round_up(row_tile, 8), _round_up(R, 8)))
    T = (R + TR - 1) // TR
    TRH = TR + 2 * HALO

    # Halo'd, channels-last, lane-dense input tiles (wrapper-side layout plumbing).
    src = np.asarray(kept, np.int64) // 2           # upconv source index per output pos
    g = np.arange(T)[:, None] * TR + np.arange(TRH)[None, :] - HALO
    g = np.clip(g, 0, R - 1)                        # clamped rows are masked in-kernel
    n_i, j_i = g // Lout, g % Lout
    x_rows = (n_i * L + src[j_i]).astype(np.int32)  # (T, TRH) rows into x (N*L, Cin)
    s_rows = g.astype(np.int32)                     # (T, TRH) rows into skip (R, Cskip)

    x_nlc = jnp.transpose(x, (0, 2, 1)).reshape(N * L, Cin)
    skip_nlc = jnp.transpose(skip, (0, 2, 1)).reshape(R, Cskip)
    xup_h = _pad_last(x_nlc[x_rows], Cin_p).astype(mm_dtype)          # (T, TRH, Cin_p)
    skip_h = _pad_last(skip_nlc[s_rows], Cskip_p).astype(mm_dtype)    # (T, TRH, Cskip_p)

    # Weights: upconv taps stacked to (Cin_p, 2*Cout_p); k=3 convs as per-tap slabs
    # split into up / skip channel groups (the channel concat is never built).
    f32 = jnp.float32
    wup = jnp.zeros((Cin_p, 2 * Cout_p), f32)
    wup = wup.at[:Cin, :Cout].set(params["wup"][:, :, 0])
    wup = wup.at[:Cin, Cout_p:Cout_p + Cout].set(params["wup"][:, :, 1])
    wup = wup.astype(mm_dtype)

    w1_t = jnp.transpose(params["w1"], (2, 1, 0))   # (3, Cout+Cskip, Cout)
    w1u = jnp.zeros((3, Cout_p, Cout_p), f32).at[:, :Cout, :Cout].set(
        w1_t[:, :Cout, :]).astype(mm_dtype)
    w1s = jnp.zeros((3, Cskip_p, Cout_p), f32).at[:, :Cskip, :Cout].set(
        w1_t[:, Cout:, :]).astype(mm_dtype)
    w2_t = jnp.transpose(params["w2"], (2, 1, 0))   # (3, Cout, Cout)
    w2p = jnp.zeros((3, Cout_p, Cout_p), f32).at[:, :Cout, :Cout].set(w2_t).astype(mm_dtype)

    row = lambda v: _pad_last(v.reshape(1, -1).astype(f32), Cout_p)
    bup_r = row(params["bup"])
    g1_r, be1_r = row(params["g1"]), row(params["be1"])
    g2_r, be2_r = row(params["g2"]), row(params["be2"])
    # b1 / b2 intentionally unused: exactly cancelled by training-mode BatchNorm.

    cparams_acc = pltpu.CompilerParams(dimension_semantics=("arbitrary",),
                                       vmem_limit_bytes=VMEM_LIMIT)
    cparams_par = pltpu.CompilerParams(dimension_semantics=("parallel",),
                                       vmem_limit_bytes=VMEM_LIMIT)

    full2 = lambda a, b: pl.BlockSpec((a, b), lambda i: (0, 0))
    full3 = lambda a, b, c: pl.BlockSpec((a, b, c), lambda i: (0, 0, 0))
    tile3 = lambda b, c: pl.BlockSpec((1, b, c), lambda i: (i, 0, 0))
    tile2 = lambda b, c: pl.BlockSpec((b, c), lambda i: (i, 0))

    # ---- pass A: upconv + conv1 -> z1 (halo'd tiles) + BN1 sum/sumsq ------------
    stage1 = functools.partial(_stage1_kernel, tr=TR, trh=TRH, lout=Lout, r=R,
                               cout_p=Cout_p, par_off=s0, mm_dtype=mm_dtype)
    z1_h, st1 = pl.pallas_call(
        stage1,
        grid=(T,),
        in_specs=[tile3(TRH, Cin_p), tile3(TRH, Cskip_p),
                  full2(Cin_p, 2 * Cout_p), full2(1, Cout_p),
                  full3(3, Cout_p, Cout_p), full3(3, Cskip_p, Cout_p)],
        out_specs=(tile3(TRH, Cout_p), full2(2, Cout_p)),
        out_shape=(jax.ShapeDtypeStruct((T, TRH, Cout_p), mm_dtype),
                   jax.ShapeDtypeStruct((2, Cout_p), jnp.float32)),
        compiler_params=cparams_acc,
    )(xup_h, skip_h, wup, bup_r, w1u, w1s)
    sc1, sh1 = _bn_scale_shift(st1, g1_r, be1_r, float(R))

    # ---- pass B: BN1-apply + ReLU + conv2 -> z2 + BN2 sum/sumsq -----------------
    stage2 = functools.partial(_stage2_kernel, tr=TR, trh=TRH, lout=Lout, r=R,
                               mm_dtype=mm_dtype)
    z2, st2 = pl.pallas_call(
        stage2,
        grid=(T,),
        in_specs=[tile3(TRH, Cout_p), full2(1, Cout_p), full2(1, Cout_p),
                  full3(3, Cout_p, Cout_p)],
        out_specs=(tile2(TR, Cout_p), full2(2, Cout_p)),
        out_shape=(jax.ShapeDtypeStruct((T * TR, Cout_p), mm_dtype),
                   jax.ShapeDtypeStruct((2, Cout_p), jnp.float32)),
        compiler_params=cparams_acc,
    )(z1_h, sc1, sh1, w2p)
    sc2, sh2 = _bn_scale_shift(st2, g2_r, be2_r, float(R))

    # ---- pass C: BN2-apply + ReLU ('parallel' -> shards across v7x's 2 TCs) -----
    out_flat = pl.pallas_call(
        _stage3_kernel,
        grid=(T,),
        in_specs=[tile2(TR, Cout_p), full2(1, Cout_p), full2(1, Cout_p)],
        out_specs=tile2(TR, Cout_p),
        out_shape=jax.ShapeDtypeStruct((T * TR, Cout_p), jnp.float32),
        compiler_params=cparams_par,
    )(z2, sc2, sh2)

    return jnp.transpose(out_flat[:R, :Cout].reshape(N, Lout, Cout), (0, 2, 1))


# ------------------------------ params / reference ----------------------------
def make_params(key, in_channels, out_channels):
    ks = jax.random.split(key, 6)
    scale = 0.1
    return {
        "wup": scale * jax.random.normal(ks[0], (in_channels, out_channels, 2), jnp.float32),
        "bup": scale * jax.random.normal(ks[1], (out_channels,), jnp.float32),
        "w1": scale * jax.random.normal(ks[2], (out_channels, in_channels, 3), jnp.float32),
        "b1": scale * jax.random.normal(ks[3], (out_channels,), jnp.float32),
        "g1": jnp.ones((out_channels,), jnp.float32),
        "be1": jnp.zeros((out_channels,), jnp.float32),
        "w2": scale * jax.random.normal(ks[4], (out_channels, out_channels, 3), jnp.float32),
        "b2": scale * jax.random.normal(ks[5], (out_channels,), jnp.float32),
        "g2": jnp.ones((out_channels,), jnp.float32),
        "be2": jnp.zeros((out_channels,), jnp.float32),
    }


def _conv1d_ref(x, w, b):
    xp = jnp.pad(x, ((0, 0), (0, 0), (1, 1)))
    L = x.shape[2]
    xs = jnp.stack([xp[:, :, k:k + L] for k in range(3)], axis=-1)   # (N,Cin,L,3)
    return jnp.einsum("nilk,oik->nol", xs, w) + b[None, :, None]


def _bn_relu_ref(h, gamma, beta):
    mu = jnp.mean(h, axis=(0, 2), keepdims=True)
    var = jnp.mean((h - mu) ** 2, axis=(0, 2), keepdims=True)
    hn = (h - mu) / jnp.sqrt(var + EPS) * gamma[None, :, None] + beta[None, :, None]
    return jnp.maximum(hn, 0.0)


def decoder_block_ref(x, skip, p):
    N, Cin, L = x.shape
    up = jnp.einsum("ncl,cok->nolk", x, p["wup"]).reshape(N, -1, 2 * L)
    up = up + p["bup"][None, :, None]
    diff = skip.shape[2] - up.shape[2]
    if diff > 0:
        skip = skip[:, :, diff // 2: -(diff - diff // 2)]
    elif diff < 0:
        up = up[:, :, -diff // 2: diff - diff // 2]
    h = jnp.concatenate([up, skip], axis=1)
    h = _bn_relu_ref(_conv1d_ref(h, p["w1"], p["b1"]), p["g1"], p["be1"])
    h = _bn_relu_ref(_conv1d_ref(h, p["w2"], p["b2"]), p["g2"], p["be2"])
    return h


if __name__ == "__main__":
    N, Cin, Cout, L = 2, 8, 4, 8            # skip has Cin-Cout channels, length 2*L
    key = jax.random.PRNGKey(0)
    kx, ks, kp = jax.random.split(key, 3)
    x = jax.random.normal(kx, (N, Cin, L), jnp.float32)
    skip = jax.random.normal(ks, (N, Cin - Cout, 2 * L), jnp.float32)
    params = make_params(kp, Cin, Cout)

    ref = decoder_block_ref(x, skip, params)

    # exactness of the tiled kernel (f32 MXU operands), single-tile grid
    out_f32 = jax.block_until_ready(decoder_block(x, skip, params, mm_dtype=jnp.float32))
    assert out_f32.shape == (N, Cout, 2 * L), out_f32.shape
    np.testing.assert_allclose(np.asarray(out_f32), np.asarray(ref), rtol=1e-4, atol=1e-4)

    # default fast path: bf16 MXU operands / intermediates, f32 accumulation & BN stats
    out_bf16 = jax.block_until_ready(decoder_block(x, skip, params))
    np.testing.assert_allclose(np.asarray(out_bf16), np.asarray(ref), rtol=5e-2, atol=5e-2)

    # multi-tile grid with a partially-filled last tile (exercises halos, per-tile
    # boundary masks, and cross-tile BatchNorm stat accumulation)
    out_tiled = jax.block_until_ready(
        decoder_block(x, skip, params, mm_dtype=jnp.float32, row_tile=24))
    np.testing.assert_allclose(np.asarray(out_tiled), np.asarray(ref), rtol=1e-4, atol=1e-4)

    print("KERNEL_OK")
</pallas_src>

<mosaic_0001>
module attributes {stable_mosaic.version = 11 : i64} {
  func.func @_stage1_kernel(%arg0: i32, %arg1: memref<1x48x128xf32, #tpu.memory_space<vmem>>, %arg2: memref<1x48x128xf32, #tpu.memory_space<vmem>>, %arg3: memref<128x256xf32, #tpu.memory_space<vmem>>, %arg4: memref<1x128xf32, #tpu.memory_space<vmem>>, %arg5: memref<3x128x128xf32, #tpu.memory_space<vmem>>, %arg6: memref<3x128x128xf32, #tpu.memory_space<vmem>>, %arg7: memref<1x48x128xf32, #tpu.memory_space<vmem>>, %arg8: memref<2x128xf32, #tpu.memory_space<vmem>>) attributes {dimension_semantics = [#tpu.dimension_semantics<arbitrary>], iteration_bounds = array<i64: 1>, scalar_prefetch = 0 : i64, scratch_operands = 0 : i64, tpu.core_type = #tpu.core_type<tc>, window_params = [{transform_indices = @transform_0, window_bounds = array<i64: 1, 48, 128>}, {transform_indices = @transform_1, window_bounds = array<i64: 1, 48, 128>}, {pipeline_mode = #tpu.pipeline_mode<synchronous>, transform_indices = @transform_2, window_bounds = array<i64: 128, 256>}, {pipeline_mode = #tpu.pipeline_mode<synchronous>, transform_indices = @transform_3, window_bounds = array<i64: 1, 128>}, {pipeline_mode = #tpu.pipeline_mode<synchronous>, transform_indices = @transform_4, window_bounds = array<i64: 3, 128, 128>}, {pipeline_mode = #tpu.pipeline_mode<synchronous>, transform_indices = @transform_5, window_bounds = array<i64: 3, 128, 128>}, {transform_indices = @transform_6, window_bounds = array<i64: 1, 48, 128>}, {pipeline_mode = #tpu.pipeline_mode<synchronous>, transform_indices = @transform_7, window_bounds = array<i64: 2, 128>}]} {
    %0 = tpu.iota {dimensions = array<i32: 0>} : vector<48x1xi32>
    %c32_i32 = arith.constant 32 : i32
    %1 = arith.muli %arg0, %c32_i32 : i32
    %2 = vector.broadcast %1 : i32 to vector<48x1xi32>
    %3 = arith.addi %2, %0 : vector<48x1xi32>
    %c8_i32 = arith.constant 8 : i32
    %4 = vector.broadcast %c8_i32 : i32 to vector<48x1xi32>
    %5 = arith.subi %3, %4 : vector<48x1xi32>
    %6 = arith.sitofp %5 : vector<48x1xi32> to vector<48x1xf32>
    %cst = arith.constant 5.000000e-01 : f32
    %7 = vector.broadcast %cst : f32 to vector<48x1xf32>
    %8 = arith.addf %6, %7 : vector<48x1xf32>
    %cst_0 = arith.constant 6.250000e-02 : f32
    %9 = vector.broadcast %cst_0 : f32 to vector<48x1xf32>
    %10 = arith.mulf %8, %9 : vector<48x1xf32>
    %11 = math.floor %10 : vector<48x1xf32>
    %12 = arith.fptosi %11 : vector<48x1xf32> to vector<48x1xi32>
    %c16_i32 = arith.constant 16 : i32
    %13 = vector.broadcast %c16_i32 : i32 to vector<48x1xi32>
    %14 = arith.muli %12, %13 : vector<48x1xi32>
    %15 = arith.subi %5, %14 : vector<48x1xi32>
    %c0_i32 = arith.constant 0 : i32
    %16 = vector.broadcast %c0_i32 : i32 to vector<48x1xi32>
    %17 = arith.cmpi ne, %15, %16 : vector<48x1xi32>
    %c15_i32 = arith.constant 15 : i32
    %18 = vector.broadcast %c15_i32 : i32 to vector<48x1xi32>
    %19 = arith.cmpi ne, %15, %18 : vector<48x1xi32>
    %c0_i32_1 = arith.constant 0 : i32
    %20 = vector.broadcast %c0_i32_1 : i32 to vector<48x1xi32>
    %21 = arith.addi %15, %20 : vector<48x1xi32>
    %c1_i32 = arith.constant 1 : i32
    %22 = vector.broadcast %c1_i32 : i32 to vector<48x1xi32>
    %23 = arith.andi %21, %22 : vector<48x1xi32>
    %c1_i32_2 = arith.constant 1 : i32
    %24 = vector.broadcast %c1_i32_2 : i32 to vector<48x1xi32>
    %25 = arith.cmpi eq, %23, %24 : vector<48x1xi32>
    %c8_i32_3 = arith.constant 8 : i32
    %26 = vector.broadcast %c8_i32_3 : i32 to vector<48x1xi32>
    %27 = arith.cmpi sge, %0, %26 : vector<48x1xi32>
    %c40_i32 = arith.constant 40 : i32
    %28 = vector.broadcast %c40_i32 : i32 to vector<48x1xi32>
    %29 = arith.cmpi slt, %0, %28 : vector<48x1xi32>
    %30 = arith.andi %27, %29 : vector<48x1xi1>
    %c0_i32_4 = arith.constant 0 : i32
    %31 = vector.broadcast %c0_i32_4 : i32 to vector<48x1xi32>
    %32 = arith.cmpi sge, %5, %31 : vector<48x1xi32>
    %33 = arith.andi %30, %32 : vector<48x1xi1>
    %c32_i32_5 = arith.constant 32 : i32
    %34 = vector.broadcast %c32_i32_5 : i32 to vector<48x1xi32>
    %35 = arith.cmpi slt, %5, %34 : vector<48x1xi32>
    %36 = arith.andi %33, %35 : vector<48x1xi1>
    %c0 = arith.constant 0 : index
    %c0_6 = arith.constant 0 : index
    %c0_7 = arith.constant 0 : index
    %37 = vector.load %arg1[%c0, %c0_6, %c0_7] : memref<1x48x128xf32, #tpu.memory_space<vmem>>, vector<1x48x128xf32>
    %38 = vector.shape_cast %37 : vector<1x48x128xf32> to vector<48x128xf32>
    %c0_8 = arith.constant 0 : index
    %c0_9 = arith.constant 0 : index
    %39 = vector.load %arg3[%c0_8, %c0_9] : memref<128x256xf32, #tpu.memory_space<vmem>>, vector<128x256xf32>
    %cst_10 = arith.constant dense<0.000000e+00> : vector<48x256xf32>
    %40 = tpu.matmul %38, %39, %cst_10 {dimension_numbers = #tpu.dot_dimension_numbers<[1], [0], [0], [1], [0, 0, 1, 1], [], []>} : vector<48x128xf32>, vector<128x256xf32>, vector<48x256xf32> -> vector<48x256xf32>
    %41 = vector.extract_strided_slice %40 {offsets = [0, 128], sizes = [48, 128], strides = [1, 1]} : vector<48x256xf32> to vector<48x128xf32>
    %42 = vector.extract_strided_slice %40 {offsets = [0, 0], sizes = [48, 128], strides = [1, 1]} : vector<48x256xf32> to vector<48x128xf32>
    %43 = vector.shape_cast %25 : vector<48x1xi1> to vector<48x1xi1>
    %44 = vector.broadcast %43 : vector<48x1xi1> to vector<48x128xi1>
    %45 = arith.select %44, %41, %42 : vector<48x128xi1>, vector<48x128xf32>
    %c0_11 = arith.constant 0 : index
    %c0_12 = arith.constant 0 : index
    %46 = vector.load %arg4[%c0_11, %c0_12] : memref<1x128xf32, #tpu.memory_space<vmem>>, vector<1x128xf32>
    %47 = vector.broadcast %46 : vector<1x128xf32> to vector<48x128xf32>
    %48 = arith.addf %45, %47 : vector<48x128xf32>
    %c0_13 = arith.constant 0 : index
    %c0_14 = arith.constant 0 : index
    %c0_15 = arith.constant 0 : index
    %49 = vector.load %arg2[%c0_13, %c0_14, %c0_15] : memref<1x48x128xf32, #tpu.memory_space<vmem>>, vector<1x48x128xf32>
    %50 = vector.shape_cast %49 : vector<1x48x128xf32> to vector<48x128xf32>
    %c1_i32_16 = arith.constant 1 : i32
    %51 = tpu.dynamic_rotate %48 by %c1_i32_16 dim 0 : vector<48x128xf32>, i32 -> vector<48x128xf32>
    %cst_17 = arith.constant 0.000000e+00 : f32
    %52 = vector.shape_cast %17 : vector<48x1xi1> to vector<48x1xi1>
    %53 = vector.broadcast %52 : vector<48x1xi1> to vector<48x128xi1>
    %54 = vector.broadcast %cst_17 : f32 to vector<48x128xf32>
    %55 = arith.select %53, %51, %54 : vector<48x128xi1>, vector<48x128xf32>
    %c47_i32 = arith.constant 47 : i32
    %56 = tpu.dynamic_rotate %48 by %c47_i32 dim 0 : vector<48x128xf32>, i32 -> vector<48x128xf32>
    %cst_18 = arith.constant 0.000000e+00 : f32
    %57 = vector.shape_cast %19 : vector<48x1xi1> to vector<48x1xi1>
    %58 = vector.broadcast %57 : vector<48x1xi1> to vector<48x128xi1>
    %59 = vector.broadcast %cst_18 : f32 to vector<48x128xf32>
    %60 = arith.select %58, %56, %59 : vector<48x128xi1>, vector<48x128xf32>
    %c1_i32_19 = arith.constant 1 : i32
    %61 = tpu.dynamic_rotate %50 by %c1_i32_19 dim 0 : vector<48x128xf32>, i32 -> vector<48x128xf32>
    %cst_20 = arith.constant 0.000000e+00 : f32
    %62 = vector.shape_cast %17 : vector<48x1xi1> to vector<48x1xi1>
    %63 = vector.broadcast %62 : vector<48x1xi1> to vector<48x128xi1>
    %64 = vector.broadcast %cst_20 : f32 to vector<48x128xf32>
    %65 = arith.select %63, %61, %64 : vector<48x128xi1>, vector<48x128xf32>
    %c47_i32_21 = arith.constant 47 : i32
    %66 = tpu.dynamic_rotate %50 by %c47_i32_21 dim 0 : vector<48x128xf32>, i32 -> vector<48x128xf32>
    %cst_22 = arith.constant 0.000000e+00 : f32
    %67 = vector.shape_cast %19 : vector<48x1xi1> to vector<48x1xi1>
    %68 = vector.broadcast %67 : vector<48x1xi1> to vector<48x128xi1>
    %69 = vector.broadcast %cst_22 : f32 to vector<48x128xf32>
    %70 = arith.select %68, %66, %69 : vector<48x128xi1>, vector<48x128xf32>
    %c0_23 = arith.constant 0 : index
    %c0_24 = arith.constant 0 : index
    %c0_25 = arith.constant 0 : index
    %71 = vector.load %arg5[%c0_23, %c0_24, %c0_25] : memref<3x128x128xf32, #tpu.memory_space<vmem>>, vector<1x128x128xf32>
    %72 = vector.shape_cast %71 : vector<1x128x128xf32> to vector<128x128xf32>
    %cst_26 = arith.constant dense<0.000000e+00> : vector<48x128xf32>
    %73 = tpu.matmul %55, %72, %cst_26 {dimension_numbers = #tpu.dot_dimension_numbers<[1], [0], [0], [1], [0, 0, 1, 1], [], []>} : vector<48x128xf32>, vector<128x128xf32>, vector<48x128xf32> -> vector<48x128xf32>
    %c1 = arith.constant 1 : index
    %c0_27 = arith.constant 0 : index
    %c0_28 = arith.constant 0 : index
    %74 = vector.load %arg5[%c1, %c0_27, %c0_28] : memref<3x128x128xf32, #tpu.memory_space<vmem>>, vector<1x128x128xf32>
    %75 = vector.shape_cast %74 : vector<1x128x128xf32> to vector<128x128xf32>
    %cst_29 = arith.constant dense<0.000000e+00> : vector<48x128xf32>
    %76 = tpu.matmul %48, %75, %cst_29 {dimension_numbers = #tpu.dot_dimension_numbers<[1], [0], [0], [1], [0, 0, 1, 1], [], []>} : vector<48x128xf32>, vector<128x128xf32>, vector<48x128xf32> -> vector<48x128xf32>
    %77 = arith.addf %73, %76 : vector<48x128xf32>
    %c2 = arith.constant 2 : index
    %c0_30 = arith.constant 0 : index
    %c0_31 = arith.constant 0 : index
    %78 = vector.load %arg5[%c2, %c0_30, %c0_31] : memref<3x128x128xf32, #tpu.memory_space<vmem>>, vector<1x128x128xf32>
    %79 = vector.shape_cast %78 : vector<1x128x128xf32> to vector<128x128xf32>
    %cst_32 = arith.constant dense<0.000000e+00> : vector<48x128xf32>
    %80 = tpu.matmul %60, %79, %cst_32 {dimension_numbers = #tpu.dot_dimension_numbers<[1], [0], [0], [1], [0, 0, 1, 1], [], []>} : vector<48x128xf32>, vector<128x128xf32>, vector<48x128xf32> -> vector<48x128xf32>
    %81 = arith.addf %77, %80 : vector<48x128xf32>
    %c0_33 = arith.constant 0 : index
    %c0_34 = arith.constant 0 : index
    %c0_35 = arith.constant 0 : index
    %82 = vector.load %arg6[%c0_33, %c0_34, %c0_35] : memref<3x128x128xf32, #tpu.memory_space<vmem>>, vector<1x128x128xf32>
    %83 = vector.shape_cast %82 : vector<1x128x128xf32> to vector<128x128xf32>
    %cst_36 = arith.constant dense<0.000000e+00> : vector<48x128xf32>
    %84 = tpu.matmul %65, %83, %cst_36 {dimension_numbers = #tpu.dot_dimension_numbers<[1], [0], [0], [1], [0, 0, 1, 1], [], []>} : vector<48x128xf32>, vector<128x128xf32>, vector<48x128xf32> -> vector<48x128xf32>
    %85 = arith.addf %81, %84 : vector<48x128xf32>
    %c1_37 = arith.constant 1 : index
    %c0_38 = arith.constant 0 : index
    %c0_39 = arith.constant 0 : index
    %86 = vector.load %arg6[%c1_37, %c0_38, %c0_39] : memref<3x128x128xf32, #tpu.memory_space<vmem>>, vector<1x128x128xf32>
    %87 = vector.shape_cast %86 : vector<1x128x128xf32> to vector<128x128xf32>
    %cst_40 = arith.constant dense<0.000000e+00> : vector<48x128xf32>
    %88 = tpu.matmul %50, %87, %cst_40 {dimension_numbers = #tpu.dot_dimension_numbers<[1], [0], [0], [1], [0, 0, 1, 1], [], []>} : vector<48x128xf32>, vector<128x128xf32>, vector<48x128xf32> -> vector<48x128xf32>
    %89 = arith.addf %85, %88 : vector<48x128xf32>
    %c2_41 = arith.constant 2 : index
    %c0_42 = arith.constant 0 : index
    %c0_43 = arith.constant 0 : index
    %90 = vector.load %arg6[%c2_41, %c0_42, %c0_43] : memref<3x128x128xf32, #tpu.memory_space<vmem>>, vector<1x128x128xf32>
    %91 = vector.shape_cast %90 : vector<1x128x128xf32> to vector<128x128xf32>
    %cst_44 = arith.constant dense<0.000000e+00> : vector<48x128xf32>
    %92 = tpu.matmul %70, %91, %cst_44 {dimension_numbers = #tpu.dot_dimension_numbers<[1], [0], [0], [1], [0, 0, 1, 1], [], []>} : vector<48x128xf32>, vector<128x128xf32>, vector<48x128xf32> -> vector<48x128xf32>
    %93 = arith.addf %89, %92 : vector<48x128xf32>
    %c0_45 = arith.constant 0 : index
    %c0_46 = arith.constant 0 : index
    %c0_47 = arith.constant 0 : index
    %94 = vector.load %arg7[%c0_45, %c0_46, %c0_47] : memref<1x48x128xf32, #tpu.memory_space<vmem>>, vector<1x48x128xf32>
    %95 = vector.shape_cast %94 : vector<1x48x128xf32> to vector<48x128xf32>
    %96 = vector.shape_cast %93 : vector<48x128xf32> to vector<1x48x128xf32>
    tpu.vector_store %arg7[%c0_45, %c0_46, %c0_47], %96 {strides = array<i32>} : memref<1x48x128xf32, #tpu.memory_space<vmem>>, vector<1x48x128xf32>,
    %cst_48 = arith.constant 0.000000e+00 : f32
    %97 = vector.shape_cast %36 : vector<48x1xi1> to vector<48x1xi1>
    %98 = vector.broadcast %97 : vector<48x1xi1> to vector<48x128xi1>
    %99 = vector.broadcast %cst_48 : f32 to vector<48x128xf32>
    %100 = arith.select %98, %93, %99 : vector<48x128xi1>, vector<48x128xf32>
    %cst_49 = arith.constant dense<0.000000e+00> : vector<128xf32>
    %101 = vector.multi_reduction <add>, %100, %cst_49 [0] : vector<48x128xf32> to vector<128xf32>
    %102 = vector.shape_cast %101 : vector<128xf32> to vector<1x128xf32>
    %103 = arith.mulf %100, %100 : vector<48x128xf32>
    %cst_50 = arith.constant dense<0.000000e+00> : vector<128xf32>
    %104 = vector.multi_reduction <add>, %103, %cst_50 [0] : vector<48x128xf32> to vector<128xf32>
    %105 = vector.shape_cast %104 : vector<128xf32> to vector<1x128xf32>
    %106 = tpu.concatenate %102, %105 in 0 : vector<1x128xf32>, vector<1x128xf32> -> vector<2x128xf32>
    %c0_i32_51 = arith.constant 0 : i32
    %107 = arith.cmpi eq, %arg0, %c0_i32_51 : i32
    %108 = arith.extui %107 : i1 to i32
    %c0_i32_52 = arith.constant 0 : i32
    %109 = arith.cmpi ne, %108, %c0_i32_52 : i32
    scf.if %109 {
      %cst_57 = arith.constant 0.000000e+00 : f32
      %113 = vector.broadcast %cst_57 : f32 to vector<2x128xf32>
      %c0_58 = arith.constant 0 : index
      %c0_59 = arith.constant 0 : index
      %114 = vector.load %arg8[%c0_58, %c0_59] : memref<2x128xf32, #tpu.memory_space<vmem>>, vector<2x128xf32>
      tpu.vector_store %arg8[%c0_58, %c0_59], %113 {strides = array<i32>} : memref<2x128xf32, #tpu.memory_space<vmem>>, vector<2x128xf32>,
    } else {
    }
    %c0_53 = arith.constant 0 : index
    %c0_54 = arith.constant 0 : index
    %110 = vector.load %arg8[%c0_53, %c0_54] : memref<2x128xf32, #tpu.memory_space<vmem>>, vector<2x128xf32>
    %111 = arith.addf %110, %106 : vector<2x128xf32>
    %c0_55 = arith.constant 0 : index
    %c0_56 = arith.constant 0 : index
    %112 = vector.load %arg8[%c0_55, %c0_56] : memref<2x128xf32, #tpu.memory_space<vmem>>, vector<2x128xf32>
    tpu.vector_store %arg8[%c0_55, %c0_56], %111 {strides = array<i32>} : memref<2x128xf32, #tpu.memory_space<vmem>>, vector<2x128xf32>,
    return
  }
  func.func @transform_0(%arg0: i32) -> (i32, i32, i32) {
    %c0_i32 = arith.constant 0 : i32
    %c0_i32_0 = arith.constant 0 : i32
    %c0_i32_1 = arith.constant 0 : i32
    return %arg0, %c0_i32, %c0_i32_0 : i32, i32, i32
  }
  func.func @transform_1(%arg0: i32) -> (i32, i32, i32) {
    %c0_i32 = arith.constant 0 : i32
    %c0_i32_0 = arith.constant 0 : i32
    %c0_i32_1 = arith.constant 0 : i32
    return %arg0, %c0_i32, %c0_i32_0 : i32, i32, i32
  }
  func.func @transform_2(%arg0: i32) -> (i32, i32) {
    %c0_i32 = arith.constant 0 : i32
    %c0_i32_0 = arith.constant 0 : i32
    %c0_i32_1 = arith.constant 0 : i32
    return %c0_i32, %c0_i32_0 : i32, i32
  }
  func.func @transform_3(%arg0: i32) -> (i32, i32) {
    %c0_i32 = arith.constant 0 : i32
    %c0_i32_0 = arith.constant 0 : i32
    %c0_i32_1 = arith.constant 0 : i32
    return %c0_i32, %c0_i32_0 : i32, i32
  }
  func.func @transform_4(%arg0: i32) -> (i32, i32, i32) {
    %c0_i32 = arith.constant 0 : i32
    %c0_i32_0 = arith.constant 0 : i32
    %c0_i32_1 = arith.constant 0 : i32
    %c0_i32_2 = arith.constant 0 : i32
    return %c0_i32, %c0_i32_0, %c0_i32_1 : i32, i32, i32
  }
  func.func @transform_5(%arg0: i32) -> (i32, i32, i32) {
    %c0_i32 = arith.constant 0 : i32
    %c0_i32_0 = arith.constant 0 : i32
    %c0_i32_1 = arith.constant 0 : i32
    %c0_i32_2 = arith.constant 0 : i32
    return %c0_i32, %c0_i32_0, %c0_i32_1 : i32, i32, i32
  }
  func.func @transform_6(%arg0: i32) -> (i32, i32, i32) {
    %c0_i32 = arith.constant 0 : i32
    %c0_i32_0 = arith.constant 0 : i32
    %c0_i32_1 = arith.constant 0 : i32
    return %arg0, %c0_i32, %c0_i32_0 : i32, i32, i32
  }
  func.func @transform_7(%arg0: i32) -> (i32, i32) {
    %c0_i32 = arith.constant 0 : i32
    %c0_i32_0 = arith.constant 0 : i32
    %c0_i32_1 = arith.constant 0 : i32
    return %c0_i32, %c0_i32_0 : i32, i32
  }
}

</mosaic_0001>

<llo_original>
// kernel: tpu_custom_call.1
$region0: #{tpu_custom_call.1}
  #allocation0 [shape = 'u32[]', space=smem, size = 0x4, offset = 0x4, fixed_abs, tag = 'smem constant byte address 0x4 - core index']
  #allocation1 [shape = 'u32[144,128]{1,0:T(1,128)}', space=vmem, size = 0x12000, scoped, tag = 'internal scratch']
  %s0 = inlined_call_operand.hbm [shape: f32[1,48,128], index: 0, kind: input, shape index: {}]
  %s1 = inlined_call_operand.hbm [shape: f32[1,48,128], index: 1, kind: input, shape index: {}]
  %s2 = inlined_call_operand.hbm [shape: f32[128,256], index: 2, kind: input, shape index: {}]
  %s3 = inlined_call_operand.vmem [shape: f32[1,128], index: 3, kind: input, shape index: {}]
  %s4 = inlined_call_operand.hbm [shape: f32[3,128,128], index: 4, kind: input, shape index: {}]
  %s5 = inlined_call_operand.hbm [shape: f32[3,128,128], index: 5, kind: input, shape index: {}]
  %s6 = inlined_call_operand.hbm [shape: f32[1,48,128], index: 6, kind: output, shape index: {0}]
  %s7 = inlined_call_operand.hbm [shape: f32[2,128], index: 7, kind: output, shape index: {1}]
  %8 = xla_tuple %s6, %s7
  %s9 = sld [smem:[#allocation0]]
  $region66: #{tpu_custom_call.1} parent=0
    _
  %s11 = ssub.s32 1, %s9
  %s12 = scalar_select 0, %s11, %s9
  $region1: #{tpu_custom_call.1} parent=0
    #allocation2 [shape = 'u8[24576]{0}', space=vmem, size = 0x6000, scoped, tag = 'input window, operand 0, single buffered']
    #allocation3 [shape = 's32[1]{0}', space=sflag, size = 0x4, scoped, tag = 'scoped memory for tpu_custom_call.1']
    #allocation4 [shape = 's32[1]{0}', space=sflag, size = 0x4, scoped, tag = 'scoped memory for tpu_custom_call.1']
    #allocation5 [shape = 'u8[24576]{0}', space=vmem, size = 0x6000, scoped, tag = 'input window, operand 1, single buffered']
    #allocation6 [shape = 's32[1]{0}', space=sflag, size = 0x4, scoped, tag = 'scoped memory for tpu_custom_call.1']
    #allocation7 [shape = 'u8[131072]{0}', space=vmem, size = 0x20000, scoped, tag = 'input window, operand 2, single buffered']
    #allocation8 [shape = 'u8[196608]{0}', space=vmem, size = 0x30000, scoped, tag = 'input window, operand 4, single buffered']
    #allocation9 [shape = 's32[1]{0}', space=sflag, size = 0x4, scoped, tag = 'scoped memory for tpu_custom_call.1']
    #allocation10 [shape = 'u8[196608]{0}', space=vmem, size = 0x30000, scoped, tag = 'input window, operand 5, single buffered']
    #allocation11 [shape = 'u8[24576]{0}', space=vmem, size = 0x6000, scoped, tag = 'output window, operand 0, single buffered']
    #allocation12 [shape = 'u8[1024]{0}', space=vmem, size = 0x400, scoped, tag = 'output window, operand 1, single buffered']
    #allocation13 [shape = 's32[1]{0}', space=sflag, size = 0x4, scoped, tag = 'scoped memory for tpu_custom_call.1']
    %13 = vsyncpa [#allocation3], 0
    %14 = vsyncpa [#allocation6], 0
    %15 = vsyncpa [#allocation9], 0
    %16 = vsyncpa [#allocation4], 0
    %17 = vsyncpa [#allocation13], 0
    // Predicated region
    $region2: #{tpu_custom_call.1} parent=1 // pred_check
      _
    $region3: #{tpu_custom_call.1} parent=1 // pred_check_branch
      %19 = sbr.rel (0) target = $region5
    $region4: #{tpu_custom_call.1} parent=1 // pred_region
      %s21 = ssub.s32 768, 768
      %22 = vsyncadd [#allocation3], %s21
      %s23 = sshll.u32 [#allocation2], 4
      %s24 = int_to_ptr.vmem [resolvable:$true] %s23
      %29 = dma.hbm_to_vmem [thread:$0]  %s0, 768, %s24, [#allocation3], 128, 128, 8
    $region5: #{tpu_custom_call.1} parent=1 // pred_fallthru
      _
    // Predicated region
    $region6: #{tpu_custom_call.1} parent=1 // pred_check
      _
    $region7: #{tpu_custom_call.1} parent=1 // pred_check_branch
      %31 = sbr.rel (0) target = $region9
    $region8: #{tpu_custom_call.1} parent=1 // pred_region
      %s33 = ssub.s32 768, 768
      %34 = vsyncadd [#allocation6], %s33
      %s35 = sshll.u32 [#allocation5], 4
      %s36 = int_to_ptr.vmem [resolvable:$true] %s35
      %41 = dma.hbm_to_vmem [thread:$0]  %s1, 768, %s36, [#allocation6], 128, 128, 8
    $region9: #{tpu_custom_call.1} parent=1 // pred_fallthru
      _
    // Predicated region
    $region10: #{tpu_custom_call.1} parent=1 // pred_check
      _
    $region11: #{tpu_custom_call.1} parent=1 // pred_check_branch
      %43 = sbr.rel (0) target = $region13
    $region12: #{tpu_custom_call.1} parent=1 // pred_region
      %s45 = ssub.s32 4096, 4096
      %46 = vsyncadd [#allocation6], %s45
      %s47 = sshll.u32 [#allocation7], 4
      %s48 = int_to_ptr.vmem [resolvable:$true] %s47
      %53 = dma.hbm_to_vmem [thread:$0]  %s2, 4096, %s48, [#allocation6], 256, 256, 16
    $region13: #{tpu_custom_call.1} parent=1 // pred_fallthru
      _
    // Predicated region
    $region14: #{tpu_custom_call.1} parent=1 // pred_check
      _
    $region15: #{tpu_custom_call.1} parent=1 // pred_check_branch
      %55 = sbr.rel (0) target = $region17
    $region16: #{tpu_custom_call.1} parent=1 // pred_region
      _
    $region17: #{tpu_custom_call.1} parent=1 // pred_fallthru
      _
    // Predicated region
    $region18: #{tpu_custom_call.1} parent=1 // pred_check
      _
    $region19: #{tpu_custom_call.1} parent=1 // pred_check_branch
      %57 = sbr.rel (0) target = $region21
    $region20: #{tpu_custom_call.1} parent=1 // pred_region
      %s59 = ssub.s32 6144, 6144
      %60 = vsyncadd [#allocation9], %s59
      %s61 = sshll.u32 [#allocation8], 4
      %s62 = int_to_ptr.vmem [resolvable:$true] %s61
      %67 = dma.hbm_to_vmem [thread:$0]  %s4, 6144, %s62, [#allocation9], 128, 128, 8
    $region21: #{tpu_custom_call.1} parent=1 // pred_fallthru
      _
    // Predicated region
    $region22: #{tpu_custom_call.1} parent=1 // pred_check
      _
    $region23: #{tpu_custom_call.1} parent=1 // pred_check_branch
      %69 = sbr.rel (0) target = $region25
    $region24: #{tpu_custom_call.1} parent=1 // pred_region
      %s71 = ssub.s32 6144, 6144
      %72 = vsyncadd [#allocation9], %s71
      %s73 = sshll.u32 [#allocation10], 4
      %s74 = int_to_ptr.vmem [resolvable:$true] %s73
      %79 = dma.hbm_to_vmem [thread:$0]  %s5, 6144, %s74, [#allocation9], 128, 128, 8
    $region25: #{tpu_custom_call.1} parent=1 // pred_fallthru
      _
    // Predicated region
    $region26: #{tpu_custom_call.1} parent=1 // pred_check
      _
    $region27: #{tpu_custom_call.1} parent=1 // pred_check_branch
      %81 = sbr.rel (0) target = $region29
    $region28: #{tpu_custom_call.1} parent=1 // pred_region
      %82 = dma.done [#allocation3], 768
    $region29: #{tpu_custom_call.1} parent=1 // pred_fallthru
      _
    // Predicated region
    $region30: #{tpu_custom_call.1} parent=1 // pred_check
      _
    $region31: #{tpu_custom_call.1} parent=1 // pred_check_branch
      %84 = sbr.rel (0) target = $region33
    $region32: #{tpu_custom_call.1} parent=1 // pred_region
      %85 = dma.done [#allocation6], 768
    $region33: #{tpu_custom_call.1} parent=1 // pred_fallthru
      _
    // Predicated region
    $region34: #{tpu_custom_call.1} parent=1 // pred_check
      _
    $region35: #{tpu_custom_call.1} parent=1 // pred_check_branch
      %87 = sbr.rel (0) target = $region37
    $region36: #{tpu_custom_call.1} parent=1 // pred_region
      %88 = dma.done [#allocation6], 4096
    $region37: #{tpu_custom_call.1} parent=1 // pred_fallthru
      _
    // Predicated region
    $region38: #{tpu_custom_call.1} parent=1 // pred_check
      _
    $region39: #{tpu_custom_call.1} parent=1 // pred_check_branch
      %90 = sbr.rel (0) target = $region41
    $region40: #{tpu_custom_call.1} parent=1 // pred_region
      %91 = dma.done [#allocation9], 6144
    $region41: #{tpu_custom_call.1} parent=1 // pred_fallthru
      _
    // Predicated region
    $region42: #{tpu_custom_call.1} parent=1 // pred_check
      _
    $region43: #{tpu_custom_call.1} parent=1 // pred_check_branch
      %93 = sbr.rel (0) target = $region45
    $region44: #{tpu_custom_call.1} parent=1 // pred_region
      %94 = dma.done [#allocation9], 6144
    $region45: #{tpu_custom_call.1} parent=1 // pred_fallthru
      _
    %v95 = vlaneseq
    %v96 = vshrl.u32 %v95, 7
    %v97 = vadd.s32 %v96, 8
    %v98 = vadd.s32 %v96, 16
    %v99 = vadd.s32 %v96, 24
    %v100 = vadd.s32 %v96, 32
    %v101 = vadd.s32 %v96, 40
    %s102 = smul.u32 0, 32
    %v103 = vstv %s102
    %v104 = vadd.s32 %v103, %v96
    %v105 = vadd.s32 %v103, %v97
    %v106 = vadd.s32 %v103, %v98
    %v107 = vadd.s32 %v103, %v99
    %v108 = vadd.s32 %v103, %v100
    %v109 = vadd.s32 %v103, %v101
    %v110 = vsub.s32 %v104, 8
    %v111 = vsub.s32 %v105, 8
    %v112 = vsub.s32 %v106, 8
    %v113 = vsub.s32 %v107, 8
    %v114 = vsub.s32 %v108, 8
    %v115 = vsub.s32 %v109, 8
    %v116 = vcvt.s32.f32 %v110
    %v117 = vcvt.s32.f32 %v111
    %v118 = vcvt.s32.f32 %v112
    %v119 = vcvt.s32.f32 %v113
    %v120 = vcvt.s32.f32 %v114
    %v121 = vcvt.s32.f32 %v115
    %v122 = vadd.f32 %v116, 0.5
    %v123 = vadd.f32 %v117, 0.5
    %v124 = vadd.f32 %v118, 0.5
    %v125 = vadd.f32 %v119, 0.5
    %v126 = vadd.f32 %v120, 0.5
    %v127 = vadd.f32 %v121, 0.5
    %v128 = vmul.f32 %v122, 0.0625
    %v129 = vmul.f32 %v123, 0.0625
    %v130 = vmul.f32 %v124, 0.0625
    %v131 = vmul.f32 %v125, 0.0625
    %v132 = vmul.f32 %v126, 0.0625
    %v133 = vmul.f32 %v127, 0.0625
    %v134 = vfloor.f32 %v128
    %v135 = vfloor.f32 %v129
    %v136 = vfloor.f32 %v130
    %v137 = vfloor.f32 %v131
    %v138 = vfloor.f32 %v132
    %v139 = vfloor.f32 %v133
    %v140 = vcvt.f32.s32.to.zero.pseudo %v134
    %v141 = vcvt.f32.s32.to.zero.pseudo %v135
    %v142 = vcvt.f32.s32.to.zero.pseudo %v136
    %v143 = vcvt.f32.s32.to.zero.pseudo %v137
    %v144 = vcvt.f32.s32.to.zero.pseudo %v138
    %v145 = vcvt.f32.s32.to.zero.pseudo %v139
    %v146 = vmul.u32 %v140, 16
    %v147 = vmul.u32 %v141, 16
    %v148 = vmul.u32 %v142, 16
    %v149 = vmul.u32 %v143, 16
    %v150 = vmul.u32 %v144, 16
    %v151 = vmul.u32 %v145, 16
    %v152 = vsub.s32 %v110, %v146
    %v153 = vsub.s32 %v111, %v147
    %v154 = vsub.s32 %v112, %v148
    %v155 = vsub.s32 %v113, %v149
    %v156 = vsub.s32 %v114, %v150
    %v157 = vsub.s32 %v115, %v151
    %vm158 = vcmp.ne.s32.totalorder %v152, 0
    %vm159 = vcmp.ne.s32.totalorder %v153, 0
    %vm160 = vcmp.ne.s32.totalorder %v154, 0
    %vm161 = vcmp.ne.s32.totalorder %v155, 0
    %vm162 = vcmp.ne.s32.totalorder %v156, 0
    %vm163 = vcmp.ne.s32.totalorder %v157, 0
    %vm164 = vcmp.ne.s32.totalorder %v152, 15
    %vm165 = vcmp.ne.s32.totalorder %v153, 15
    %vm166 = vcmp.ne.s32.totalorder %v154, 15
    %vm167 = vcmp.ne.s32.totalorder %v155, 15
    %vm168 = vcmp.ne.s32.totalorder %v156, 15
    %vm169 = vcmp.ne.s32.totalorder %v157, 15
    %v170 = vand.u32 %v152, 1
    %v171 = vand.u32 %v153, 1
    %v172 = vand.u32 %v154, 1
    %v173 = vand.u32 %v155, 1
    %v174 = vand.u32 %v156, 1
    %v175 = vand.u32 %v157, 1
    %vm176 = vcmp.eq.s32.totalorder %v170, 1
    %vm177 = vcmp.eq.s32.totalorder %v171, 1
    %vm178 = vcmp.eq.s32.totalorder %v172, 1
    %vm179 = vcmp.eq.s32.totalorder %v173, 1
    %vm180 = vcmp.eq.s32.totalorder %v174, 1
    %vm181 = vcmp.eq.s32.totalorder %v175, 1
    %vm182 = vcmp.ge.s32.totalorder %v96, 8
    %vm183 = vcmp.ge.s32.totalorder %v97, 8
    %vm184 = vcmp.ge.s32.totalorder %v98, 8
    %vm185 = vcmp.ge.s32.totalorder %v99, 8
    %vm186 = vcmp.ge.s32.totalorder %v100, 8
    %vm187 = vcmp.ge.s32.totalorder %v101, 8
    %vm188 = vcmp.lt.s32.totalorder %v96, 40
    %vm189 = vcmp.lt.s32.totalorder %v97, 40
    %vm190 = vcmp.lt.s32.totalorder %v98, 40
    %vm191 = vcmp.lt.s32.totalorder %v99, 40
    %vm192 = vcmp.lt.s32.totalorder %v100, 40
    %vm193 = vcmp.lt.s32.totalorder %v101, 40
    %vm194 = vmand %vm182, %vm188
    %vm195 = vmand %vm183, %vm189
    %vm196 = vmand %vm184, %vm190
    %vm197 = vmand %vm185, %vm191
    %vm198 = vmand %vm186, %vm192
    %vm199 = vmand %vm187, %vm193
    %vm200 = vcmp.ge.s32.totalorder %v110, 0
    %vm201 = vcmp.ge.s32.totalorder %v111, 0
    %vm202 = vcmp.ge.s32.totalorder %v112, 0
    %vm203 = vcmp.ge.s32.totalorder %v113, 0
    %vm204 = vcmp.ge.s32.totalorder %v114, 0
    %vm205 = vcmp.ge.s32.totalorder %v115, 0
    %vm206 = vmand %vm194, %vm200
    %vm207 = vmand %vm195, %vm201
    %vm208 = vmand %vm196, %vm202
    %vm209 = vmand %vm197, %vm203
    %vm210 = vmand %vm198, %vm204
    %vm211 = vmand %vm199, %vm205
    %vm212 = vcmp.lt.s32.totalorder %v110, 32
    %vm213 = vcmp.lt.s32.totalorder %v111, 32
    %vm214 = vcmp.lt.s32.totalorder %v112, 32
    %vm215 = vcmp.lt.s32.totalorder %v113, 32
    %vm216 = vcmp.lt.s32.totalorder %v114, 32
    %vm217 = vcmp.lt.s32.totalorder %v115, 32
    %vm218 = vmand %vm206, %vm212
    %vm219 = vmand %vm207, %vm213
    %vm220 = vmand %vm208, %vm214
    %vm221 = vmand %vm209, %vm215
    %vm222 = vmand %vm210, %vm216
    %vm223 = vmand %vm211, %vm217
    %v224 = vld [vmem:[#allocation2] sm:$0xff]
    %v225 = vld [vmem:[#allocation2 + $0x8] sm:$0xff]
    %v226 = vld [vmem:[#allocation2 + $0x10] sm:$0xff]
    %v227 = vld [vmem:[#allocation2 + $0x18] sm:$0xff]
    %v228 = vld [vmem:[#allocation2 + $0x20] sm:$0xff]
    %v229 = vld [vmem:[#allocation2 + $0x28] sm:$0xff]
    %v230 = vld [vmem:[#allocation7] sm:$0xff]
    %v231 = vld [vmem:[#allocation7 + $0x8] sm:$0xff]
    %v232 = vld [vmem:[#allocation7 + $0x10] sm:$0xff]
    %v233 = vld [vmem:[#allocation7 + $0x18] sm:$0xff]
    %v234 = vld [vmem:[#allocation7 + $0x20] sm:$0xff]
    %v235 = vld [vmem:[#allocation7 + $0x28] sm:$0xff]
    %v236 = vld [vmem:[#allocation7 + $0x30] sm:$0xff]
    %v237 = vld [vmem:[#allocation7 + $0x38] sm:$0xff]
    %v238 = vld [vmem:[#allocation7 + $0x40] sm:$0xff]
    %v239 = vld [vmem:[#allocation7 + $0x48] sm:$0xff]
    %v240 = vld [vmem:[#allocation7 + $0x50] sm:$0xff]
    %v241 = vld [vmem:[#allocation7 + $0x58] sm:$0xff]
    %v242 = vld [vmem:[#allocation7 + $0x60] sm:$0xff]
    %v243 = vld [vmem:[#allocation7 + $0x68] sm:$0xff]
    %v244 = vld [vmem:[#allocation7 + $0x70] sm:$0xff]
    %v245 = vld [vmem:[#allocation7 + $0x78] sm:$0xff]
    %v246 = vld [vmem:[#allocation7 + $0x80] sm:$0xff]
    %v247 = vld [vmem:[#allocation7 + $0x88] sm:$0xff]
    %v248 = vld [vmem:[#allocation7 + $0x90] sm:$0xff]
    %v249 = vld [vmem:[#allocation7 + $0x98] sm:$0xff]
    %v250 = vld [vmem:[#allocation7 + $0xa0] sm:$0xff]
    %v251 = vld [vmem:[#allocation7 + $0xa8] sm:$0xff]
    %v252 = vld [vmem:[#allocation7 + $0xb0] sm:$0xff]
    %v253 = vld [vmem:[#allocation7 + $0xb8] sm:$0xff]
    %v254 = vld [vmem:[#allocation7 + $0xc0] sm:$0xff]
    %v255 = vld [vmem:[#allocation7 + $0xc8] sm:$0xff]
    %v256 = vld [vmem:[#allocation7 + $0xd0] sm:$0xff]
    %v257 = vld [vmem:[#allocation7 + $0xd8] sm:$0xff]
    %v258 = vld [vmem:[#allocation7 + $0xe0] sm:$0xff]
    %v259 = vld [vmem:[#allocation7 + $0xe8] sm:$0xff]
    %v260 = vld [vmem:[#allocation7 + $0xf0] sm:$0xff]
    %v261 = vld [vmem:[#allocation7 + $0xf8] sm:$0xff]
    %262 = vmatprep.subr.mxu0 %v231
    %263 = vmatpush1.msra.mxu0 %v230
    %264 = vmatprep.subr.mxu0 %v233
    %265 = vmatpush1.msra.mxu0 %v232
    %266 = vmatprep.subr.mxu0 %v235
    %267 = vmatpush1.msra.mxu0 %v234
    %268 = vmatprep.subr.mxu0 %v237
    %269 = vmatpush1.msra.mxu0 %v236
    %270 = vmatprep.subr.mxu0 %v239
    %271 = vmatpush1.msra.mxu0 %v238
    %272 = vmatprep.subr.mxu0 %v241
    %273 = vmatpush1.msra.mxu0 %v240
    %274 = vmatprep.subr.mxu0 %v243
    %275 = vmatpush1.msra.mxu0 %v242
    %276 = vmatprep.subr.mxu0 %v245
    %277 = vmatpush1.msra.mxu0 %v244
    %278 = vmatprep.subr.mxu0 %v247
    %279 = vmatpush1.msra.mxu0 %v246
    %280 = vmatprep.subr.mxu0 %v249
    %281 = vmatpush1.msra.mxu0 %v248
    %282 = vmatprep.subr.mxu0 %v251
    %283 = vmatpush1.msra.mxu0 %v250
    %284 = vmatprep.subr.mxu0 %v253
    %285 = vmatpush1.msra.mxu0 %v252
    %286 = vmatprep.subr.mxu0 %v255
    %287 = vmatpush1.msra.mxu0 %v254
    %288 = vmatprep.subr.mxu0 %v257
    %289 = vmatpush1.msra.mxu0 %v256
    %290 = vmatprep.subr.mxu0 %v259
    %291 = vmatpush1.msra.mxu0 %v258
    %292 = vmatprep.subr.mxu0 %v261
    %293 = vmatpush1.msra.mxu0 %v260
    %294 = vmatprep.subr.mxu0 0.0
    %295 = vmatpush1.msra.mxu0 0.0
    %296 = vmatprep.subr.mxu0 0.0
    %297 = vmatpush1.msra.mxu0 0.0
    %298 = vmatprep.subr.mxu0 0.0
    %299 = vmatpush1.msra.mxu0 0.0
    %300 = vmatprep.subr.mxu0 0.0
    %301 = vmatpush1.msra.mxu0 0.0
    %302 = vmatprep.subr.mxu0 0.0
    %303 = vmatpush1.msra.mxu0 0.0
    %304 = vmatprep.subr.mxu0 0.0
    %305 = vmatpush1.msra.mxu0 0.0
    %306 = vmatprep.subr.mxu0 0.0
    %307 = vmatpush1.msra.mxu0 0.0
    %308 = vmatprep.subr.mxu0 0.0
    %309 = vmatpush1.msra.mxu0 0.0
    %310 = vmatprep.subr.mxu0 0.0
    %311 = vmatpush1.msra.mxu0 0.0
    %312 = vmatprep.subr.mxu0 0.0
    %313 = vmatpush1.msra.mxu0 0.0
    %314 = vmatprep.subr.mxu0 0.0
    %315 = vmatpush1.msra.mxu0 0.0
    %316 = vmatprep.subr.mxu0 0.0
    %317 = vmatpush1.msra.mxu0 0.0
    %318 = vmatprep.subr.mxu0 0.0
    %319 = vmatpush1.msra.mxu0 0.0
    %320 = vmatprep.subr.mxu0 0.0
    %321 = vmatpush1.msra.mxu0 0.0
    %322 = vmatprep.subr.mxu0 0.0
    %323 = vmatpush1.msra.mxu0 0.0
    %324 = vmatprep.subr.mxu0 0.0
    %325 = vmatpush1.msra.mxu0 0.0
    %326 = vmatprep.mubr.f32.mxu0 0.0
    %327 = vmatmul.mubr.f32.gmra.mrb[0].mxu0 %v224
    %v328 = vpop.f32.mrb[0].mxu0
    %v329 = vadd.f32 0.0, %v328
    %v330 = vpop.f32.mrb[0].mxu0
    %v331 = vadd.f32 0.0, %v330
    %332 = vmatprep.mubr.f32.mxu0 0.0
    %333 = vmatmul.mubr.f32.gmra.mrb[0].mxu0 %v225
    %v334 = vpop.f32.mrb[0].mxu0
    %v335 = vadd.f32 0.0, %v334
    %v336 = vpop.f32.mrb[0].mxu0
    %v337 = vadd.f32 0.0, %v336
    %338 = vmatprep.mubr.f32.mxu0 0.0
    %339 = vmatmul.mubr.f32.gmra.mrb[0].mxu0 %v226
    %v340 = vpop.f32.mrb[0].mxu0
    %v341 = vadd.f32 0.0, %v340
    %v342 = vpop.f32.mrb[0].mxu0
    %v343 = vadd.f32 0.0, %v342
    %344 = vmatprep.mubr.f32.mxu0 0.0
    %345 = vmatmul.mubr.f32.gmra.mrb[0].mxu0 %v227
    %v346 = vpop.f32.mrb[0].mxu0
    %v347 = vadd.f32 0.0, %v346
    %v348 = vpop.f32.mrb[0].mxu0
    %v349 = vadd.f32 0.0, %v348
    %350 = vmatprep.mubr.f32.mxu0 0.0
    %351 = vmatmul.mubr.f32.gmra.mrb[0].mxu0 %v228
    %v352 = vpop.f32.mrb[0].mxu0
    %v353 = vadd.f32 0.0, %v352
    %v354 = vpop.f32.mrb[0].mxu0
    %v355 = vadd.f32 0.0, %v354
    %356 = vmatprep.mubr.f32.mxu0 0.0
    %357 = vmatmul.mubr.f32.gmra.mrb[0].mxu0 %v229
    %v358 = vpop.f32.mrb[0].mxu0
    %v359 = vadd.f32 0.0, %v358
    %v360 = vpop.f32.mrb[0].mxu0
    %v361 = vadd.f32 0.0, %v360
    %362 = vdwg.mxu0
    %v363 = vsel %vm176, 1, 0
    %v364 = vsel %vm177, 1, 0
    %v365 = vsel %vm178, 1, 0
    %v366 = vsel %vm179, 1, 0
    %v367 = vsel %vm180, 1, 0
    %v368 = vsel %vm181, 1, 0
    %vm369 = vcmp.eq.s32.totalorder %v363, 1
    %vm370 = vcmp.eq.s32.totalorder %v364, 1
    %vm371 = vcmp.eq.s32.totalorder %v365, 1
    %vm372 = vcmp.eq.s32.totalorder %v366, 1
    %vm373 = vcmp.eq.s32.totalorder %v367, 1
    %vm374 = vcmp.eq.s32.totalorder %v368, 1
    %v375 = vsel %vm369, %v331, %v329
    %v376 = vsel %vm370, %v337, %v335
    %v377 = vsel %vm371, %v343, %v341
    %v378 = vsel %vm372, %v349, %v347
    %v379 = vsel %vm373, %v355, %v353
    %v380 = vsel %vm374, %v361, %v359
    %v381 = vld [vmem:[%s3] sm:$0x1]
    %v383 = vlaneseq
    %v384 = vshrl.u32 %v383, 7
    %v385 = vsub.s32 0, %v384
    %v386 = vrot.slane %v381, %v385
    %v388 = vadd.f32 %v375, %v386
    %v389 = vadd.f32 %v376, %v386
    %v390 = vadd.f32 %v377, %v386
    %v391 = vadd.f32 %v378, %v386
    %v392 = vadd.f32 %v379, %v386
    %v393 = vadd.f32 %v380, %v386
    %v394 = vld [vmem:[#allocation5] sm:$0xff]
    %v395 = vld [vmem:[#allocation5 + $0x8] sm:$0xff]
    %v396 = vld [vmem:[#allocation5 + $0x10] sm:$0xff]
    %v397 = vld [vmem:[#allocation5 + $0x18] sm:$0xff]
    %v398 = vld [vmem:[#allocation5 + $0x20] sm:$0xff]
    %v399 = vld [vmem:[#allocation5 + $0x28] sm:$0xff]
    %v400 = vrot.slane %v388, 7
    %v401 = vrot.slane %v389, 7
    %v402 = vrot.slane %v390, 7
    %v403 = vrot.slane %v391, 7
    %v404 = vrot.slane %v392, 7
    %v405 = vrot.slane %v393, 7
    %vm406 = vcmp.lt.s32.totalorder %v96, 1
    %v407 = vsel %vm406, %v404, %v405
    %v408 = vsel %vm406, %v403, %v404
    %v409 = vsel %vm406, %v402, %v403
    %v410 = vsel %vm406, %v401, %v402
    %v411 = vsel %vm406, %v400, %v401
    %v412 = vsel %vm406, %v405, %v400
    %v413 = vsel %vm158, 1, 0
    %v414 = vsel %vm159, 1, 0
    %v415 = vsel %vm160, 1, 0
    %v416 = vsel %vm161, 1, 0
    %v417 = vsel %vm162, 1, 0
    %v418 = vsel %vm163, 1, 0
    %vm419 = vcmp.eq.s32.totalorder %v413, 1
    %vm420 = vcmp.eq.s32.totalorder %v414, 1
    %vm421 = vcmp.eq.s32.totalorder %v415, 1
    %vm422 = vcmp.eq.s32.totalorder %v416, 1
    %vm423 = vcmp.eq.s32.totalorder %v417, 1
    %vm424 = vcmp.eq.s32.totalorder %v418, 1
    %v425 = vsel %vm419, %v412, 0.0
    %v426 = vsel %vm420, %v411, 0.0
    %v427 = vsel %vm421, %v410, 0.0
    %v428 = vsel %vm422, %v409, 0.0
    %v429 = vsel %vm423, %v408, 0.0
    %v430 = vsel %vm424, %v407, 0.0
    %v431 = vrot.slane %v388, 1
    %v432 = vrot.slane %v389, 1
    %v433 = vrot.slane %v390, 1
    %v434 = vrot.slane %v391, 1
    %v435 = vrot.slane %v392, 1
    %v436 = vrot.slane %v393, 1
    %vm437 = vcmp.lt.s32.totalorder %v96, 7
    %v438 = vsel %vm437, %v435, %v436
    %v439 = vsel %vm437, %v434, %v435
    %v440 = vsel %vm437, %v433, %v434
    %v441 = vsel %vm437, %v432, %v433
    %v442 = vsel %vm437, %v431, %v432
    %v443 = vsel %vm437, %v436, %v431
    %v444 = vsel %vm164, 1, 0
    %v445 = vsel %vm165, 1, 0
    %v446 = vsel %vm166, 1, 0
    %v447 = vsel %vm167, 1, 0
    %v448 = vsel %vm168, 1, 0
    %v449 = vsel %vm169, 1, 0
    %vm450 = vcmp.eq.s32.totalorder %v444, 1
    %vm451 = vcmp.eq.s32.totalorder %v445, 1
    %vm452 = vcmp.eq.s32.totalorder %v446, 1
    %vm453 = vcmp.eq.s32.totalorder %v447, 1
    %vm454 = vcmp.eq.s32.totalorder %v448, 1
    %vm455 = vcmp.eq.s32.totalorder %v449, 1
    %v456 = vsel %vm450, %v442, 0.0
    %v457 = vsel %vm451, %v441, 0.0
    %v458 = vsel %vm452, %v440, 0.0
    %v459 = vsel %vm453, %v439, 0.0
    %v460 = vsel %vm454, %v438, 0.0
    %v461 = vsel %vm455, %v443, 0.0
    %v462 = vrot.slane %v394, 7
    %v463 = vrot.slane %v395, 7
    %v464 = vrot.slane %v396, 7
    %v465 = vrot.slane %v397, 7
    %v466 = vrot.slane %v398, 7
    %v467 = vrot.slane %v399, 7
    %v468 = vsel %vm406, %v466, %v467
    %v469 = vsel %vm406, %v465, %v466
    %v470 = vsel %vm406, %v464, %v465
    %v471 = vsel %vm406, %v463, %v464
    %v472 = vsel %vm406, %v462, %v463
    %v473 = vsel %vm406, %v467, %v462
    %v474 = vsel %vm419, %v473, 0.0
    %v475 = vsel %vm420, %v472, 0.0
    %v476 = vsel %vm421, %v471, 0.0
    %v477 = vsel %vm422, %v470, 0.0
    %v478 = vsel %vm423, %v469, 0.0
    %v479 = vsel %vm424, %v468, 0.0
    %v480 = vrot.slane %v394, 1
    %v481 = vrot.slane %v395, 1
    %v482 = vrot.slane %v396, 1
    %v483 = vrot.slane %v397, 1
    %v484 = vrot.slane %v398, 1
    %v485 = vrot.slane %v399, 1
    %v486 = vsel %vm437, %v484, %v485
    %v487 = vsel %vm437, %v483, %v484
    %v488 = vsel %vm437, %v482, %v483
    %v489 = vsel %vm437, %v481, %v482
    %v490 = vsel %vm437, %v480, %v481
    %v491 = vsel %vm437, %v485, %v480
    %v492 = vsel %vm450, %v490, 0.0
    %v493 = vsel %vm451, %v489, 0.0
    %v494 = vsel %vm452, %v488, 0.0
    %v495 = vsel %vm453, %v487, 0.0
    %v496 = vsel %vm454, %v486, 0.0
    %v497 = vsel %vm455, %v491, 0.0
    %v498 = vld [vmem:[#allocation8] sm:$0xff]
    %v499 = vld [vmem:[#allocation8 + $0x8] sm:$0xff]
    %v500 = vld [vmem:[#allocation8 + $0x10] sm:$0xff]
    %v501 = vld [vmem:[#allocation8 + $0x18] sm:$0xff]
    %v502 = vld [vmem:[#allocation8 + $0x20] sm:$0xff]
    %v503 = vld [vmem:[#allocation8 + $0x28] sm:$0xff]
    %v504 = vld [vmem:[#allocation8 + $0x30] sm:$0xff]
    %v505 = vld [vmem:[#allocation8 + $0x38] sm:$0xff]
    %v506 = vld [vmem:[#allocation8 + $0x40] sm:$0xff]
    %v507 = vld [vmem:[#allocation8 + $0x48] sm:$0xff]
    %v508 = vld [vmem:[#allocation8 + $0x50] sm:$0xff]
    %v509 = vld [vmem:[#allocation8 + $0x58] sm:$0xff]
    %v510 = vld [vmem:[#allocation8 + $0x60] sm:$0xff]
    %v511 = vld [vmem:[#allocation8 + $0x68] sm:$0xff]
    %v512 = vld [vmem:[#allocation8 + $0x70] sm:$0xff]
    %v513 = vld [vmem:[#allocation8 + $0x78] sm:$0xff]
    %s514 = scalar_lea.vmem [#allocation8], 128
    %v515 = vld [vmem:[%s514] sm:$0xff]
    %v516 = vld [vmem:[%s514 + $0x8] sm:$0xff]
    %v517 = vld [vmem:[%s514 + $0x10] sm:$0xff]
    %v518 = vld [vmem:[%s514 + $0x18] sm:$0xff]
    %v519 = vld [vmem:[%s514 + $0x20] sm:$0xff]
    %v520 = vld [vmem:[%s514 + $0x28] sm:$0xff]
    %v521 = vld [vmem:[%s514 + $0x30] sm:$0xff]
    %v522 = vld [vmem:[%s514 + $0x38] sm:$0xff]
    %v523 = vld [vmem:[%s514 + $0x40] sm:$0xff]
    %v524 = vld [vmem:[%s514 + $0x48] sm:$0xff]
    %v525 = vld [vmem:[%s514 + $0x50] sm:$0xff]
    %v526 = vld [vmem:[%s514 + $0x58] sm:$0xff]
    %v527 = vld [vmem:[%s514 + $0x60] sm:$0xff]
    %v528 = vld [vmem:[%s514 + $0x68] sm:$0xff]
    %v529 = vld [vmem:[%s514 + $0x70] sm:$0xff]
    %v530 = vld [vmem:[%s514 + $0x78] sm:$0xff]
    %531 = vmatprep.subr.mxu0 0.0
    %532 = vmatpush1.msra.mxu0 %v515
    %533 = vmatprep.subr.mxu0 0.0
    %534 = vmatpush1.msra.mxu0 %v516
    %535 = vmatprep.subr.mxu0 0.0
    %536 = vmatpush1.msra.mxu0 %v517
    %537 = vmatprep.subr.mxu0 0.0
    %538 = vmatpush1.msra.mxu0 %v518
    %539 = vmatprep.subr.mxu0 0.0
    %540 = vmatpush1.msra.mxu0 %v519
    %541 = vmatprep.subr.mxu0 0.0
    %542 = vmatpush1.msra.mxu0 %v520
    %543 = vmatprep.subr.mxu0 0.0
    %544 = vmatpush1.msra.mxu0 %v521
    %545 = vmatprep.subr.mxu0 0.0
    %546 = vmatpush1.msra.mxu0 %v522
    %547 = vmatprep.subr.mxu0 0.0
    %548 = vmatpush1.msra.mxu0 %v523
    %549 = vmatprep.subr.mxu0 0.0
    %550 = vmatpush1.msra.mxu0 %v524
    %551 = vmatprep.subr.mxu0 0.0
    %552 = vmatpush1.msra.mxu0 %v525
    %553 = vmatprep.subr.mxu0 0.0
    %554 = vmatpush1.msra.mxu0 %v526
    %555 = vmatprep.subr.mxu0 0.0
    %556 = vmatpush1.msra.mxu0 %v527
    %557 = vmatprep.subr.mxu0 0.0
    %558 = vmatpush1.msra.mxu0 %v528
    %559 = vmatprep.subr.mxu0 0.0
    %560 = vmatpush1.msra.mxu0 %v529
    %561 = vmatprep.subr.mxu0 0.0
    %562 = vmatpush1.msra.mxu0 %v530
    %563 = vmatprep.subr.mxu0 0.0
    %564 = vmatpush1.msra.mxu0 0.0
    %565 = vmatprep.subr.mxu0 0.0
    %566 = vmatpush1.msra.mxu0 0.0
    %567 = vmatprep.subr.mxu0 0.0
    %568 = vmatpush1.msra.mxu0 0.0
    %569 = vmatprep.subr.mxu0 0.0
    %570 = vmatpush1.msra.mxu0 0.0
    %571 = vmatprep.subr.mxu0 0.0
    %572 = vmatpush1.msra.mxu0 0.0
    %573 = vmatprep.subr.mxu0 0.0
    %574 = vmatpush1.msra.mxu0 0.0
    %575 = vmatprep.subr.mxu0 0.0
    %576 = vmatpush1.msra.mxu0 0.0
    %577 = vmatprep.subr.mxu0 0.0
    %578 = vmatpush1.msra.mxu0 0.0
    %579 = vmatprep.subr.mxu0 0.0
    %580 = vmatpush1.msra.mxu0 0.0
    %581 = vmatprep.subr.mxu0 0.0
    %582 = vmatpush1.msra.mxu0 0.0
    %583 = vmatprep.subr.mxu0 0.0
    %584 = vmatpush1.msra.mxu0 0.0
    %585 = vmatprep.subr.mxu0 0.0
    %586 = vmatpush1.msra.mxu0 0.0
    %587 = vmatprep.subr.mxu0 0.0
    %588 = vmatpush1.msra.mxu0 0.0
    %589 = vmatprep.subr.mxu0 0.0
    %590 = vmatpush1.msra.mxu0 0.0
    %591 = vmatprep.subr.mxu0 0.0
    %592 = vmatpush1.msra.mxu0 0.0
    %593 = vmatprep.subr.mxu0 0.0
    %594 = vmatpush1.msra.mxu0 0.0
    %595 = vmatprep.mubr.f32.mxu0 0.0
    %596 = vmatmul.mubr.f32.gmra.mrb[0].mxu0 %v388
    %v597 = vpop.f32.mrb[0].mxu0
    %v598 = vadd.f32 0.0, %v597
    %v599 = vpop.f32.mrb[0].mxu0
    %600 = vmatprep.mubr.f32.mxu0 0.0
    %601 = vmatmul.mubr.f32.gmra.mrb[0].mxu0 %v389
    %v602 = vpop.f32.mrb[0].mxu0
    %v603 = vadd.f32 0.0, %v602
    %v604 = vpop.f32.mrb[0].mxu0
    %605 = vmatprep.mubr.f32.mxu0 0.0
    %606 = vmatmul.mubr.f32.gmra.mrb[0].mxu0 %v390
    %v607 = vpop.f32.mrb[0].mxu0
    %v608 = vadd.f32 0.0, %v607
    %v609 = vpop.f32.mrb[0].mxu0
    %610 = vmatprep.mubr.f32.mxu0 0.0
    %611 = vmatmul.mubr.f32.gmra.mrb[0].mxu0 %v391
    %v612 = vpop.f32.mrb[0].mxu0
    %v613 = vadd.f32 0.0, %v612
    %v614 = vpop.f32.mrb[0].mxu0
    %615 = vmatprep.mubr.f32.mxu0 0.0
    %616 = vmatmul.mubr.f32.gmra.mrb[0].mxu0 %v392
    %v617 = vpop.f32.mrb[0].mxu0
    %v618 = vadd.f32 0.0, %v617
    %v619 = vpop.f32.mrb[0].mxu0
    %620 = vmatprep.mubr.f32.mxu0 0.0
    %621 = vmatmul.mubr.f32.gmra.mrb[0].mxu0 %v393
    %v622 = vpop.f32.mrb[0].mxu0
    %v623 = vadd.f32 0.0, %v622
    %v624 = vpop.f32.mrb[0].mxu0
    %625 = vdwg.mxu0
    %626 = vmatprep.subr.mxu0 0.0
    %627 = vmatpush1.msra.mxu0 %v498
    %628 = vmatprep.subr.mxu0 0.0
    %629 = vmatpush1.msra.mxu0 %v499
    %630 = vmatprep.subr.mxu0 0.0
    %631 = vmatpush1.msra.mxu0 %v500
    %632 = vmatprep.subr.mxu0 0.0
    %633 = vmatpush1.msra.mxu0 %v501
    %634 = vmatprep.subr.mxu0 0.0
    %635 = vmatpush1.msra.mxu0 %v502
    %636 = vmatprep.subr.mxu0 0.0
    %637 = vmatpush1.msra.mxu0 %v503
    %638 = vmatprep.subr.mxu0 0.0
    %639 = vmatpush1.msra.mxu0 %v504
    %640 = vmatprep.subr.mxu0 0.0
    %641 = vmatpush1.msra.mxu0 %v505
    %642 = vmatprep.subr.mxu0 0.0
    %643 = vmatpush1.msra.mxu0 %v506
    %644 = vmatprep.subr.mxu0 0.0
    %645 = vmatpush1.msra.mxu0 %v507
    %646 = vmatprep.subr.mxu0 0.0
    %647 = vmatpush1.msra.mxu0 %v508
    %648 = vmatprep.subr.mxu0 0.0
    %649 = vmatpush1.msra.mxu0 %v509
    %650 = vmatprep.subr.mxu0 0.0
    %651 = vmatpush1.msra.mxu0 %v510
    %652 = vmatprep.subr.mxu0 0.0
    %653 = vmatpush1.msra.mxu0 %v511
    %654 = vmatprep.subr.mxu0 0.0
    %655 = vmatpush1.msra.mxu0 %v512
    %656 = vmatprep.subr.mxu0 0.0
    %657 = vmatpush1.msra.mxu0 %v513
    %658 = vmatprep.subr.mxu0 0.0
    %659 = vmatpush1.msra.mxu0 0.0
    %660 = vmatprep.subr.mxu0 0.0
    %661 = vmatpush1.msra.mxu0 0.0
    %662 = vmatprep.subr.mxu0 0.0
    %663 = vmatpush1.msra.mxu0 0.0
    %664 = vmatprep.subr.mxu0 0.0
    %665 = vmatpush1.msra.mxu0 0.0
    %666 = vmatprep.subr.mxu0 0.0
    %667 = vmatpush1.msra.mxu0 0.0
    %668 = vmatprep.subr.mxu0 0.0
    %669 = vmatpush1.msra.mxu0 0.0
    %670 = vmatprep.subr.mxu0 0.0
    %671 = vmatpush1.msra.mxu0 0.0
    %672 = vmatprep.subr.mxu0 0.0
    %673 = vmatpush1.msra.mxu0 0.0
    %674 = vmatprep.subr.mxu0 0.0
    %675 = vmatpush1.msra.mxu0 0.0
    %676 = vmatprep.subr.mxu0 0.0
    %677 = vmatpush1.msra.mxu0 0.0
    %678 = vmatprep.subr.mxu0 0.0
    %679 = vmatpush1.msra.mxu0 0.0
    %680 = vmatprep.subr.mxu0 0.0
    %681 = vmatpush1.msra.mxu0 0.0
    %682 = vmatprep.subr.mxu0 0.0
    %683 = vmatpush1.msra.mxu0 0.0
    %684 = vmatprep.subr.mxu0 0.0
    %685 = vmatpush1.msra.mxu0 0.0
    %686 = vmatprep.subr.mxu0 0.0
    %687 = vmatpush1.msra.mxu0 0.0
    %688 = vmatprep.subr.mxu0 0.0
    %689 = vmatpush1.msra.mxu0 0.0
    %690 = vmatprep.mubr.f32.mxu0 0.0
    %691 = vmatmul.mubr.f32.gmra.mrb[0].mxu0 %v425
    %v692 = vpop.f32.mrb[0].mxu0
    %v693 = vadd.f32 %v598, %v692
    %v694 = vpop.f32.mrb[0].mxu0
    %695 = vmatprep.mubr.f32.mxu0 0.0
    %696 = vmatmul.mubr.f32.gmra.mrb[0].mxu0 %v426
    %v697 = vpop.f32.mrb[0].mxu0
    %v698 = vadd.f32 %v603, %v697
    %v699 = vpop.f32.mrb[0].mxu0
    %700 = vmatprep.mubr.f32.mxu0 0.0
    %701 = vmatmul.mubr.f32.gmra.mrb[0].mxu0 %v427
    %v702 = vpop.f32.mrb[0].mxu0
    %v703 = vadd.f32 %v608, %v702
    %v704 = vpop.f32.mrb[0].mxu0
    %705 = vmatprep.mubr.f32.mxu0 0.0
    %706 = vmatmul.mubr.f32.gmra.mrb[0].mxu0 %v428
    %v707 = vpop.f32.mrb[0].mxu0
    %v708 = vadd.f32 %v613, %v707
    %v709 = vpop.f32.mrb[0].mxu0
    %710 = vmatprep.mubr.f32.mxu0 0.0
    %711 = vmatmul.mubr.f32.gmra.mrb[0].mxu0 %v429
    %v712 = vpop.f32.mrb[0].mxu0
    %v713 = vadd.f32 %v618, %v712
    %v714 = vpop.f32.mrb[0].mxu0
    %715 = vmatprep.mubr.f32.mxu0 0.0
    %716 = vmatmul.mubr.f32.gmra.mrb[0].mxu0 %v430
    %v717 = vpop.f32.mrb[0].mxu0
    %v718 = vadd.f32 %v623, %v717
    %v719 = vpop.f32.mrb[0].mxu0
    %720 = vdwg.mxu0
    %s721 = scalar_lea.vmem [#allocation8], 256
    %v722 = vld [vmem:[%s721] sm:$0xff]
    %v723 = vld [vmem:[%s721 + $0x8] sm:$0xff]
    %v724 = vld [vmem:[%s721 + $0x10] sm:$0xff]
    %v725 = vld [vmem:[%s721 + $0x18] sm:$0xff]
    %v726 = vld [vmem:[%s721 + $0x20] sm:$0xff]
    %v727 = vld [vmem:[%s721 + $0x28] sm:$0xff]
    %v728 = vld [vmem:[%s721 + $0x30] sm:$0xff]
    %v729 = vld [vmem:[%s721 + $0x38] sm:$0xff]
    %v730 = vld [vmem:[%s721 + $0x40] sm:$0xff]
    %v731 = vld [vmem:[%s721 + $0x48] sm:$0xff]
    %v732 = vld [vmem:[%s721 + $0x50] sm:$0xff]
    %v733 = vld [vmem:[%s721 + $0x58] sm:$0xff]
    %v734 = vld [vmem:[%s721 + $0x60] sm:$0xff]
    %v735 = vld [vmem:[%s721 + $0x68] sm:$0xff]
    %v736 = vld [vmem:[%s721 + $0x70] sm:$0xff]
    %v737 = vld [vmem:[%s721 + $0x78] sm:$0xff]
    %738 = vmatprep.subr.mxu0 0.0
    %739 = vmatpush1.msra.mxu0 %v722
    %740 = vmatprep.subr.mxu0 0.0
    %741 = vmatpush1.msra.mxu0 %v723
    %742 = vmatprep.subr.mxu0 0.0
    %743 = vmatpush1.msra.mxu0 %v724
    %744 = vmatprep.subr.mxu0 0.0
    %745 = vmatpush1.msra.mxu0 %v725
    %746 = vmatprep.subr.mxu0 0.0
    %747 = vmatpush1.msra.mxu0 %v726
    %748 = vmatprep.subr.mxu0 0.0
    %749 = vmatpush1.msra.mxu0 %v727
    %750 = vmatprep.subr.mxu0 0.0
    %751 = vmatpush1.msra.mxu0 %v728
    %752 = vmatprep.subr.mxu0 0.0
    %753 = vmatpush1.msra.mxu0 %v729
    %754 = vmatprep.subr.mxu0 0.0
    %755 = vmatpush1.msra.mxu0 %v730
    %756 = vmatprep.subr.mxu0 0.0
    %757 = vmatpush1.msra.mxu0 %v731
    %758 = vmatprep.subr.mxu0 0.0
    %759 = vmatpush1.msra.mxu0 %v732
    %760 = vmatprep.subr.mxu0 0.0
    %761 = vmatpush1.msra.mxu0 %v733
    %762 = vmatprep.subr.mxu0 0.0
    %763 = vmatpush1.msra.mxu0 %v734
    %764 = vmatprep.subr.mxu0 0.0
    %765 = vmatpush1.msra.mxu0 %v735
    %766 = vmatprep.subr.mxu0 0.0
    %767 = vmatpush1.msra.mxu0 %v736
    %768 = vmatprep.subr.mxu0 0.0
    %769 = vmatpush1.msra.mxu0 %v737
    %770 = vmatprep.subr.mxu0 0.0
    %771 = vmatpush1.msra.mxu0 0.0
    %772 = vmatprep.subr.mxu0 0.0
    %773 = vmatpush1.msra.mxu0 0.0
    %774 = vmatprep.subr.mxu0 0.0
    %775 = vmatpush1.msra.mxu0 0.0
    %776 = vmatprep.subr.mxu0 0.0
    %777 = vmatpush1.msra.mxu0 0.0
    %778 = vmatprep.subr.mxu0 0.0
    %779 = vmatpush1.msra.mxu0 0.0
    %780 = vmatprep.subr.mxu0 0.0
    %781 = vmatpush1.msra.mxu0 0.0
    %782 = vmatprep.subr.mxu0 0.0
    %783 = vmatpush1.msra.mxu0 0.0
    %784 = vmatprep.subr.mxu0 0.0
    %785 = vmatpush1.msra.mxu0 0.0
    %786 = vmatprep.subr.mxu0 0.0
    %787 = vmatpush1.msra.mxu0 0.0
    %788 = vmatprep.subr.mxu0 0.0
    %789 = vmatpush1.msra.mxu0 0.0
    %790 = vmatprep.subr.mxu0 0.0
    %791 = vmatpush1.msra.mxu0 0.0
    %792 = vmatprep.subr.mxu0 0.0
    %793 = vmatpush1.msra.mxu0 0.0
    %794 = vmatprep.subr.mxu0 0.0
    %795 = vmatpush1.msra.mxu0 0.0
    %796 = vmatprep.subr.mxu0 0.0
    %797 = vmatpush1.msra.mxu0 0.0
    %798 = vmatprep.subr.mxu0 0.0
    %799 = vmatpush1.msra.mxu0 0.0
    %800 = vmatprep.subr.mxu0 0.0
    %801 = vmatpush1.msra.mxu0 0.0
    %802 = vmatprep.mubr.f32.mxu0 0.0
    %803 = vmatmul.mubr.f32.gmra.mrb[0].mxu0 %v456
    %v804 = vpop.f32.mrb[0].mxu0
    %v805 = vadd.f32 0.0, %v804
    %v806 = vpop.f32.mrb[0].mxu0
    %807 = vmatprep.mubr.f32.mxu0 0.0
    %808 = vmatmul.mubr.f32.gmra.mrb[0].mxu0 %v457
    %v809 = vpop.f32.mrb[0].mxu0
    %v810 = vadd.f32 0.0, %v809
    %v811 = vpop.f32.mrb[0].mxu0
    %812 = vmatprep.mubr.f32.mxu0 0.0
    %813 = vmatmul.mubr.f32.gmra.mrb[0].mxu0 %v458
    %v814 = vpop.f32.mrb[0].mxu0
    %v815 = vadd.f32 0.0, %v814
    %v816 = vpop.f32.mrb[0].mxu0
    %817 = vmatprep.mubr.f32.mxu0 0.0
    %818 = vmatmul.mubr.f32.gmra.mrb[0].mxu0 %v459
    %v819 = vpop.f32.mrb[0].mxu0
    %v820 = vadd.f32 0.0, %v819
    %v821 = vpop.f32.mrb[0].mxu0
    %822 = vmatprep.mubr.f32.mxu0 0.0
    %823 = vmatmul.mubr.f32.gmra.mrb[0].mxu0 %v460
    %v824 = vpop.f32.mrb[0].mxu0
    %v825 = vadd.f32 0.0, %v824
    %v826 = vpop.f32.mrb[0].mxu0
    %827 = vmatprep.mubr.f32.mxu0 0.0
    %828 = vmatmul.mubr.f32.gmra.mrb[0].mxu0 %v461
    %v829 = vpop.f32.mrb[0].mxu0
    %v830 = vadd.f32 0.0, %v829
    %v831 = vpop.f32.mrb[0].mxu0
    %832 = vdwg.mxu0
    %v833 = vadd.f32 %v693, %v805
    %v834 = vadd.f32 %v698, %v810
    %v835 = vadd.f32 %v703, %v815
    %v836 = vadd.f32 %v708, %v820
    %v837 = vadd.f32 %v713, %v825
    %v838 = vadd.f32 %v718, %v830
    %v839 = vld [vmem:[#allocation10] sm:$0xff]
    %v840 = vld [vmem:[#allocation10 + $0x8] sm:$0xff]
    %v841 = vld [vmem:[#allocation10 + $0x10] sm:$0xff]
    %v842 = vld [vmem:[#allocation10 + $0x18] sm:$0xff]
    %v843 = vld [vmem:[#allocation10 + $0x20] sm:$0xff]
    %v844 = vld [vmem:[#allocation10 + $0x28] sm:$0xff]
    %v845 = vld [vmem:[#allocation10 + $0x30] sm:$0xff]
    %v846 = vld [vmem:[#allocation10 + $0x38] sm:$0xff]
    %v847 = vld [vmem:[#allocation10 + $0x40] sm:$0xff]
    %v848 = vld [vmem:[#allocation10 + $0x48] sm:$0xff]
    %v849 = vld [vmem:[#allocation10 + $0x50] sm:$0xff]
    %v850 = vld [vmem:[#allocation10 + $0x58] sm:$0xff]
    %v851 = vld [vmem:[#allocation10 + $0x60] sm:$0xff]
    %v852 = vld [vmem:[#allocation10 + $0x68] sm:$0xff]
    %v853 = vld [vmem:[#allocation10 + $0x70] sm:$0xff]
    %v854 = vld [vmem:[#allocation10 + $0x78] sm:$0xff]
    %855 = vmatprep.subr.mxu0 0.0
    %856 = vmatpush1.msra.mxu0 %v839
    %857 = vmatprep.subr.mxu0 0.0
    %858 = vmatpush1.msra.mxu0 %v840
    %859 = vmatprep.subr.mxu0 0.0
    %860 = vmatpush1.msra.mxu0 %v841
    %861 = vmatprep.subr.mxu0 0.0
    %862 = vmatpush1.msra.mxu0 %v842
    %863 = vmatprep.subr.mxu0 0.0
    %864 = vmatpush1.msra.mxu0 %v843
    %865 = vmatprep.subr.mxu0 0.0
    %866 = vmatpush1.msra.mxu0 %v844
    %867 = vmatprep.subr.mxu0 0.0
    %868 = vmatpush1.msra.mxu0 %v845
    %869 = vmatprep.subr.mxu0 0.0
    %870 = vmatpush1.msra.mxu0 %v846
    %871 = vmatprep.subr.mxu0 0.0
    %872 = vmatpush1.msra.mxu0 %v847
    %873 = vmatprep.subr.mxu0 0.0
    %874 = vmatpush1.msra.mxu0 %v848
    %875 = vmatprep.subr.mxu0 0.0
    %876 = vmatpush1.msra.mxu0 %v849
    %877 = vmatprep.subr.mxu0 0.0
    %878 = vmatpush1.msra.mxu0 %v850
    %879 = vmatprep.subr.mxu0 0.0
    %880 = vmatpush1.msra.mxu0 %v851
    %881 = vmatprep.subr.mxu0 0.0
    %882 = vmatpush1.msra.mxu0 %v852
    %883 = vmatprep.subr.mxu0 0.0
    %884 = vmatpush1.msra.mxu0 %v853
    %885 = vmatprep.subr.mxu0 0.0
    %886 = vmatpush1.msra.mxu0 %v854
    %887 = vmatprep.subr.mxu0 0.0
    %888 = vmatpush1.msra.mxu0 0.0
    %889 = vmatprep.subr.mxu0 0.0
    %890 = vmatpush1.msra.mxu0 0.0
    %891 = vmatprep.subr.mxu0 0.0
    %892 = vmatpush1.msra.mxu0 0.0
    %893 = vmatprep.subr.mxu0 0.0
    %894 = vmatpush1.msra.mxu0 0.0
    %895 = vmatprep.subr.mxu0 0.0
    %896 = vmatpush1.msra.mxu0 0.0
    %897 = vmatprep.subr.mxu0 0.0
    %898 = vmatpush1.msra.mxu0 0.0
    %899 = vmatprep.subr.mxu0 0.0
    %900 = vmatpush1.msra.mxu0 0.0
    %901 = vmatprep.subr.mxu0 0.0
    %902 = vmatpush1.msra.mxu0 0.0
    %903 = vmatprep.subr.mxu0 0.0
    %904 = vmatpush1.msra.mxu0 0.0
    %905 = vmatprep.subr.mxu0 0.0
    %906 = vmatpush1.msra.mxu0 0.0
    %907 = vmatprep.subr.mxu0 0.0
    %908 = vmatpush1.msra.mxu0 0.0
    %909 = vmatprep.subr.mxu0 0.0
    %910 = vmatpush1.msra.mxu0 0.0
    %911 = vmatprep.subr.mxu0 0.0
    %912 = vmatpush1.msra.mxu0 0.0
    %913 = vmatprep.subr.mxu0 0.0
    %914 = vmatpush1.msra.mxu0 0.0
    %915 = vmatprep.subr.mxu0 0.0
    %916 = vmatpush1.msra.mxu0 0.0
    %917 = vmatprep.subr.mxu0 0.0
    %918 = vmatpush1.msra.mxu0 0.0
    %919 = vmatprep.mubr.f32.mxu0 0.0
    %920 = vmatmul.mubr.f32.gmra.mrb[0].mxu0 %v474
    %v921 = vpop.f32.mrb[0].mxu0
    %v922 = vadd.f32 0.0, %v921
    %v923 = vpop.f32.mrb[0].mxu0
    %924 = vmatprep.mubr.f32.mxu0 0.0
    %925 = vmatmul.mubr.f32.gmra.mrb[0].mxu0 %v475
    %v926 = vpop.f32.mrb[0].mxu0
    %v927 = vadd.f32 0.0, %v926
    %v928 = vpop.f32.mrb[0].mxu0
    %929 = vmatprep.mubr.f32.mxu0 0.0
    %930 = vmatmul.mubr.f32.gmra.mrb[0].mxu0 %v476
    %v931 = vpop.f32.mrb[0].mxu0
    %v932 = vadd.f32 0.0, %v931
    %v933 = vpop.f32.mrb[0].mxu0
    %934 = vmatprep.mubr.f32.mxu0 0.0
    %935 = vmatmul.mubr.f32.gmra.mrb[0].mxu0 %v477
    %v936 = vpop.f32.mrb[0].mxu0
    %v937 = vadd.f32 0.0, %v936
    %v938 = vpop.f32.mrb[0].mxu0
    %939 = vmatprep.mubr.f32.mxu0 0.0
    %940 = vmatmul.mubr.f32.gmra.mrb[0].mxu0 %v478
    %v941 = vpop.f32.mrb[0].mxu0
    %v942 = vadd.f32 0.0, %v941
    %v943 = vpop.f32.mrb[0].mxu0
    %944 = vmatprep.mubr.f32.mxu0 0.0
    %945 = vmatmul.mubr.f32.gmra.mrb[0].mxu0 %v479
    %v946 = vpop.f32.mrb[0].mxu0
    %v947 = vadd.f32 0.0, %v946
    %v948 = vpop.f32.mrb[0].mxu0
    %949 = vdwg.mxu0
    %v950 = vadd.f32 %v833, %v922
    %v951 = vadd.f32 %v834, %v927
    %v952 = vadd.f32 %v835, %v932
    %v953 = vadd.f32 %v836, %v937
    %v954 = vadd.f32 %v837, %v942
    %v955 = vadd.f32 %v838, %v947
    %s956 = scalar_lea.vmem [#allocation10], 128
    %v957 = vld [vmem:[%s956] sm:$0xff]
    %v958 = vld [vmem:[%s956 + $0x8] sm:$0xff]
    %v959 = vld [vmem:[%s956 + $0x10] sm:$0xff]
    %v960 = vld [vmem:[%s956 + $0x18] sm:$0xff]
    %v961 = vld [vmem:[%s956 + $0x20] sm:$0xff]
    %v962 = vld [vmem:[%s956 + $0x28] sm:$0xff]
    %v963 = vld [vmem:[%s956 + $0x30] sm:$0xff]
    %v964 = vld [vmem:[%s956 + $0x38] sm:$0xff]
    %v965 = vld [vmem:[%s956 + $0x40] sm:$0xff]
    %v966 = vld [vmem:[%s956 + $0x48] sm:$0xff]
    %v967 = vld [vmem:[%s956 + $0x50] sm:$0xff]
    %v968 = vld [vmem:[%s956 + $0x58] sm:$0xff]
    %v969 = vld [vmem:[%s956 + $0x60] sm:$0xff]
    %v970 = vld [vmem:[%s956 + $0x68] sm:$0xff]
    %v971 = vld [vmem:[%s956 + $0x70] sm:$0xff]
    %v972 = vld [vmem:[%s956 + $0x78] sm:$0xff]
    %973 = vmatprep.subr.mxu0 0.0
    %974 = vmatpush1.msra.mxu0 %v957
    %975 = vmatprep.subr.mxu0 0.0
    %976 = vmatpush1.msra.mxu0 %v958
    %977 = vmatprep.subr.mxu0 0.0
    %978 = vmatpush1.msra.mxu0 %v959
    %979 = vmatprep.subr.mxu0 0.0
    %980 = vmatpush1.msra.mxu0 %v960
    %981 = vmatprep.subr.mxu0 0.0
    %982 = vmatpush1.msra.mxu0 %v961
    %983 = vmatprep.subr.mxu0 0.0
    %984 = vmatpush1.msra.mxu0 %v962
    %985 = vmatprep.subr.mxu0 0.0
    %986 = vmatpush1.msra.mxu0 %v963
    %987 = vmatprep.subr.mxu0 0.0
    %988 = vmatpush1.msra.mxu0 %v964
    %989 = vmatprep.subr.mxu0 0.0
    %990 = vmatpush1.msra.mxu0 %v965
    %991 = vmatprep.subr.mxu0 0.0
    %992 = vmatpush1.msra.mxu0 %v966
    %993 = vmatprep.subr.mxu0 0.0
    %994 = vmatpush1.msra.mxu0 %v967
    %995 = vmatprep.subr.mxu0 0.0
    %996 = vmatpush1.msra.mxu0 %v968
    %997 = vmatprep.subr.mxu0 0.0
    %998 = vmatpush1.msra.mxu0 %v969
    %999 = vmatprep.subr.mxu0 0.0
    %1000 = vmatpush1.msra.mxu0 %v970
    %1001 = vmatprep.subr.mxu0 0.0
    %1002 = vmatpush1.msra.mxu0 %v971
    %1003 = vmatprep.subr.mxu0 0.0
    %1004 = vmatpush1.msra.mxu0 %v972
    %1005 = vmatprep.subr.mxu0 0.0
    %1006 = vmatpush1.msra.mxu0 0.0
    %1007 = vmatprep.subr.mxu0 0.0
    %1008 = vmatpush1.msra.mxu0 0.0
    %1009 = vmatprep.subr.mxu0 0.0
    %1010 = vmatpush1.msra.mxu0 0.0
    %1011 = vmatprep.subr.mxu0 0.0
    %1012 = vmatpush1.msra.mxu0 0.0
    %1013 = vmatprep.subr.mxu0 0.0
    %1014 = vmatpush1.msra.mxu0 0.0
    %1015 = vmatprep.subr.mxu0 0.0
    %1016 = vmatpush1.msra.mxu0 0.0
    %1017 = vmatprep.subr.mxu0 0.0
    %1018 = vmatpush1.msra.mxu0 0.0
    %1019 = vmatprep.subr.mxu0 0.0
    %1020 = vmatpush1.msra.mxu0 0.0
    %1021 = vmatprep.subr.mxu0 0.0
    %1022 = vmatpush1.msra.mxu0 0.0
    %1023 = vmatprep.subr.mxu0 0.0
    %1024 = vmatpush1.msra.mxu0 0.0
    %1025 = vmatprep.subr.mxu0 0.0
    %1026 = vmatpush1.msra.mxu0 0.0
    %1027 = vmatprep.subr.mxu0 0.0
    %1028 = vmatpush1.msra.mxu0 0.0
    %1029 = vmatprep.subr.mxu0 0.0
    %1030 = vmatpush1.msra.mxu0 0.0
    %1031 = vmatprep.subr.mxu0 0.0
    %1032 = vmatpush1.msra.mxu0 0.0
    %1033 = vmatprep.subr.mxu0 0.0
    %1034 = vmatpush1.msra.mxu0 0.0
    %1035 = vmatprep.subr.mxu0 0.0
    %1036 = vmatpush1.msra.mxu0 0.0
    %1037 = vmatprep.mubr.f32.mxu0 0.0
    %1038 = vmatmul.mubr.f32.gmra.mrb[0].mxu0 %v394
    %v1039 = vpop.f32.mrb[0].mxu0
    %v1040 = vadd.f32 0.0, %v1039
    %v1041 = vpop.f32.mrb[0].mxu0
    %1042 = vmatprep.mubr.f32.mxu0 0.0
    %1043 = vmatmul.mubr.f32.gmra.mrb[0].mxu0 %v395
    %v1044 = vpop.f32.mrb[0].mxu0
    %v1045 = vadd.f32 0.0, %v1044
    %v1046 = vpop.f32.mrb[0].mxu0
    %1047 = vmatprep.mubr.f32.mxu0 0.0
    %1048 = vmatmul.mubr.f32.gmra.mrb[0].mxu0 %v396
    %v1049 = vpop.f32.mrb[0].mxu0
    %v1050 = vadd.f32 0.0, %v1049
    %v1051 = vpop.f32.mrb[0].mxu0
    %1052 = vmatprep.mubr.f32.mxu0 0.0
    %1053 = vmatmul.mubr.f32.gmra.mrb[0].mxu0 %v397
    %v1054 = vpop.f32.mrb[0].mxu0
    %v1055 = vadd.f32 0.0, %v1054
    %v1056 = vpop.f32.mrb[0].mxu0
    %1057 = vmatprep.mubr.f32.mxu0 0.0
    %1058 = vmatmul.mubr.f32.gmra.mrb[0].mxu0 %v398
    %v1059 = vpop.f32.mrb[0].mxu0
    %v1060 = vadd.f32 0.0, %v1059
    %v1061 = vpop.f32.mrb[0].mxu0
    %1062 = vmatprep.mubr.f32.mxu0 0.0
    %1063 = vmatmul.mubr.f32.gmra.mrb[0].mxu0 %v399
    %v1064 = vpop.f32.mrb[0].mxu0
    %v1065 = vadd.f32 0.0, %v1064
    %v1066 = vpop.f32.mrb[0].mxu0
    %1067 = vdwg.mxu0
    %v1068 = vadd.f32 %v950, %v1040
    %v1069 = vadd.f32 %v951, %v1045
    %v1070 = vadd.f32 %v952, %v1050
    %v1071 = vadd.f32 %v953, %v1055
    %v1072 = vadd.f32 %v954, %v1060
    %v1073 = vadd.f32 %v955, %v1065
    %s1074 = scalar_lea.vmem [#allocation10], 256
    %v1075 = vld [vmem:[%s1074] sm:$0xff]
    %v1076 = vld [vmem:[%s1074 + $0x8] sm:$0xff]
    %v1077 = vld [vmem:[%s1074 + $0x10] sm:$0xff]
    %v1078 = vld [vmem:[%s1074 + $0x18] sm:$0xff]
    %v1079 = vld [vmem:[%s1074 + $0x20] sm:$0xff]
    %v1080 = vld [vmem:[%s1074 + $0x28] sm:$0xff]
    %v1081 = vld [vmem:[%s1074 + $0x30] sm:$0xff]
    %v1082 = vld [vmem:[%s1074 + $0x38] sm:$0xff]
    %v1083 = vld [vmem:[%s1074 + $0x40] sm:$0xff]
    %v1084 = vld [vmem:[%s1074 + $0x48] sm:$0xff]
    %v1085 = vld [vmem:[%s1074 + $0x50] sm:$0xff]
    %v1086 = vld [vmem:[%s1074 + $0x58] sm:$0xff]
    %v1087 = vld [vmem:[%s1074 + $0x60] sm:$0xff]
    %v1088 = vld [vmem:[%s1074 + $0x68] sm:$0xff]
    %v1089 = vld [vmem:[%s1074 + $0x70] sm:$0xff]
    %v1090 = vld [vmem:[%s1074 + $0x78] sm:$0xff]
    %1091 = vmatprep.subr.mxu0 0.0
    %1092 = vmatpush1.msra.mxu0 %v1075
    %1093 = vmatprep.subr.mxu0 0.0
    %1094 = vmatpush1.msra.mxu0 %v1076
    %1095 = vmatprep.subr.mxu0 0.0
    %1096 = vmatpush1.msra.mxu0 %v1077
    %1097 = vmatprep.subr.mxu0 0.0
    %1098 = vmatpush1.msra.mxu0 %v1078
    %1099 = vmatprep.subr.mxu0 0.0
    %1100 = vmatpush1.msra.mxu0 %v1079
    %1101 = vmatprep.subr.mxu0 0.0
    %1102 = vmatpush1.msra.mxu0 %v1080
    %1103 = vmatprep.subr.mxu0 0.0
    %1104 = vmatpush1.msra.mxu0 %v1081
    %1105 = vmatprep.subr.mxu0 0.0
    %1106 = vmatpush1.msra.mxu0 %v1082
    %1107 = vmatprep.subr.mxu0 0.0
    %1108 = vmatpush1.msra.mxu0 %v1083
    %1109 = vmatprep.subr.mxu0 0.0
    %1110 = vmatpush1.msra.mxu0 %v1084
    %1111 = vmatprep.subr.mxu0 0.0
    %1112 = vmatpush1.msra.mxu0 %v1085
    %1113 = vmatprep.subr.mxu0 0.0
    %1114 = vmatpush1.msra.mxu0 %v1086
    %1115 = vmatprep.subr.mxu0 0.0
    %1116 = vmatpush1.msra.mxu0 %v1087
    %1117 = vmatprep.subr.mxu0 0.0
    %1118 = vmatpush1.msra.mxu0 %v1088
    %1119 = vmatprep.subr.mxu0 0.0
    %1120 = vmatpush1.msra.mxu0 %v1089
    %1121 = vmatprep.subr.mxu0 0.0
    %1122 = vmatpush1.msra.mxu0 %v1090
    %1123 = vmatprep.subr.mxu0 0.0
    %1124 = vmatpush1.msra.mxu0 0.0
    %1125 = vmatprep.subr.mxu0 0.0
    %1126 = vmatpush1.msra.mxu0 0.0
    %1127 = vmatprep.subr.mxu0 0.0
    %1128 = vmatpush1.msra.mxu0 0.0
    %1129 = vmatprep.subr.mxu0 0.0
    %1130 = vmatpush1.msra.mxu0 0.0
    %1131 = vmatprep.subr.mxu0 0.0
    %1132 = vmatpush1.msra.mxu0 0.0
    %1133 = vmatprep.subr.mxu0 0.0
    %1134 = vmatpush1.msra.mxu0 0.0
    %1135 = vmatprep.subr.mxu0 0.0
    %1136 = vmatpush1.msra.mxu0 0.0
    %1137 = vmatprep.subr.mxu0 0.0
    %1138 = vmatpush1.msra.mxu0 0.0
    %1139 = vmatprep.subr.mxu0 0.0
    %1140 = vmatpush1.msra.mxu0 0.0
    %1141 = vmatprep.subr.mxu0 0.0
    %1142 = vmatpush1.msra.mxu0 0.0
    %1143 = vmatprep.subr.mxu0 0.0
    %1144 = vmatpush1.msra.mxu0 0.0
    %1145 = vmatprep.subr.mxu0 0.0
    %1146 = vmatpush1.msra.mxu0 0.0
    %1147 = vmatprep.subr.mxu0 0.0
    %1148 = vmatpush1.msra.mxu0 0.0
    %1149 = vmatprep.subr.mxu0 0.0
    %1150 = vmatpush1.msra.mxu0 0.0
    %1151 = vmatprep.subr.mxu0 0.0
    %1152 = vmatpush1.msra.mxu0 0.0
    %1153 = vmatprep.subr.mxu0 0.0
    %1154 = vmatpush1.msra.mxu0 0.0
    %1155 = vmatprep.mubr.f32.mxu0 0.0
    %1156 = vmatmul.mubr.f32.gmra.mrb[0].mxu0 %v492
    %v1157 = vpop.f32.mrb[0].mxu0
    %v1158 = vadd.f32 0.0, %v1157
    %v1159 = vpop.f32.mrb[0].mxu0
    %1160 = vmatprep.mubr.f32.mxu0 0.0
    %1161 = vmatmul.mubr.f32.gmra.mrb[0].mxu0 %v493
    %v1162 = vpop.f32.mrb[0].mxu0
    %v1163 = vadd.f32 0.0, %v1162
    %v1164 = vpop.f32.mrb[0].mxu0
    %1165 = vmatprep.mubr.f32.mxu0 0.0
    %1166 = vmatmul.mubr.f32.gmra.mrb[0].mxu0 %v494
    %v1167 = vpop.f32.mrb[0].mxu0
    %v1168 = vadd.f32 0.0, %v1167
    %v1169 = vpop.f32.mrb[0].mxu0
    %1170 = vmatprep.mubr.f32.mxu0 0.0
    %1171 = vmatmul.mubr.f32.gmra.mrb[0].mxu0 %v495
    %v1172 = vpop.f32.mrb[0].mxu0
    %v1173 = vadd.f32 0.0, %v1172
    %v1174 = vpop.f32.mrb[0].mxu0
    %1175 = vmatprep.mubr.f32.mxu0 0.0
    %1176 = vmatmul.mubr.f32.gmra.mrb[0].mxu0 %v496
    %v1177 = vpop.f32.mrb[0].mxu0
    %v1178 = vadd.f32 0.0, %v1177
    %v1179 = vpop.f32.mrb[0].mxu0
    %1180 = vmatprep.mubr.f32.mxu0 0.0
    %1181 = vmatmul.mubr.f32.gmra.mrb[0].mxu0 %v497
    %v1182 = vpop.f32.mrb[0].mxu0
    %v1183 = vadd.f32 0.0, %v1182
    %v1184 = vpop.f32.mrb[0].mxu0
    %1185 = vdwg.mxu0
    %v1186 = vadd.f32 %v1068, %v1158
    %v1187 = vadd.f32 %v1069, %v1163
    %v1188 = vadd.f32 %v1070, %v1168
    %v1189 = vadd.f32 %v1071, %v1173
    %v1190 = vadd.f32 %v1072, %v1178
    %v1191 = vadd.f32 %v1073, %v1183
    %1192 = vst [vmem:[#allocation11] sm:$0xff] %v1186
    %1193 = vst [vmem:[#allocation11 + $0x8] sm:$0xff] %v1187
    %1194 = vst [vmem:[#allocation11 + $0x10] sm:$0xff] %v1188
    %1195 = vst [vmem:[#allocation11 + $0x18] sm:$0xff] %v1189
    %1196 = vst [vmem:[#allocation11 + $0x20] sm:$0xff] %v1190
    %1197 = vst [vmem:[#allocation11 + $0x28] sm:$0xff] %v1191
    %v1198 = vsel %vm218, 1, 0
    %v1199 = vsel %vm219, 1, 0
    %v1200 = vsel %vm220, 1, 0
    %v1201 = vsel %vm221, 1, 0
    %v1202 = vsel %vm222, 1, 0
    %v1203 = vsel %vm223, 1, 0
    %vm1204 = vcmp.eq.s32.totalorder %v1198, 1
    %vm1205 = vcmp.eq.s32.totalorder %v1199, 1
    %vm1206 = vcmp.eq.s32.totalorder %v1200, 1
    %vm1207 = vcmp.eq.s32.totalorder %v1201, 1
    %vm1208 = vcmp.eq.s32.totalorder %v1202, 1
    %vm1209 = vcmp.eq.s32.totalorder %v1203, 1
    %v1210 = vsel %vm1204, %v1186, 0.0
    %v1211 = vsel %vm1205, %v1187, 0.0
    %v1212 = vsel %vm1206, %v1188, 0.0
    %v1213 = vsel %vm1207, %v1189, 0.0
    %v1214 = vsel %vm1208, %v1190, 0.0
    %v1215 = vsel %vm1209, %v1191, 0.0
    %v1216 = vadd.f32 %v1210, %v1211
    %v1217 = vadd.f32 %v1216, %v1212
    %v1218 = vadd.f32 %v1217, %v1213
    %v1219 = vadd.f32 %v1218, %v1214
    %v1220 = vadd.f32 %v1219, %v1215
    %v1221 = vrot.slane %v1220, 4
    %v1222 = vadd.f32 %v1220, %v1221
    %v1223 = vrot.slane %v1222, 2
    %v1224 = vadd.f32 %v1222, %v1223
    %v1225 = vrot.slane %v1224, 1
    %v1226 = vadd.f32 %v1224, %v1225
    %v1227 = vmul.f32 %v1210, %v1210
    %v1228 = vmul.f32 %v1211, %v1211
    %v1229 = vmul.f32 %v1212, %v1212
    %v1230 = vmul.f32 %v1213, %v1213
    %v1231 = vmul.f32 %v1214, %v1214
    %v1232 = vmul.f32 %v1215, %v1215
    %v1233 = vadd.f32 %v1227, %v1228
    %v1234 = vadd.f32 %v1233, %v1229
    %v1235 = vadd.f32 %v1234, %v1230
    %v1236 = vadd.f32 %v1235, %v1231
    %v1237 = vadd.f32 %v1236, %v1232
    %v1238 = vrot.slane %v1237, 4
    %v1239 = vadd.f32 %v1237, %v1238
    %v1240 = vrot.slane %v1239, 2
    %v1241 = vadd.f32 %v1239, %v1240
    %v1242 = vrot.slane %v1241, 1
    %v1243 = vadd.f32 %v1241, %v1242
    %vm1244 = vcmask 1040384
    %v1245 = vsel %vm1244, %v1226, %v1243
    %p1246 = scmp.eq.s32.totalorder 0, 0
    // Predicated region
    $region46: #{tpu_custom_call.1} parent=1 // pred_check
      %p1247 = pneg %p1246
    $region47: #{tpu_custom_call.1} parent=1 // pred_check_branch
      %1249 = sbr.rel (%p1247) target = $region49
    $region48: #{tpu_custom_call.1} parent=1 // pred_region
      %1250 = vst [vmem:[#allocation12] sm:$0x3] 0.0
    $region49: #{tpu_custom_call.1} parent=1 // pred_fallthru
      _
    %v1251 = vld [vmem:[#allocation12] sm:$0x3]
    %v1252 = vadd.f32 %v1251, %v1245
    %1253 = vst [vmem:[#allocation12] sm:$0x3] %v1252
    // Predicated region
    $region50: #{tpu_custom_call.1} parent=1 // pred_check
      _
    $region51: #{tpu_custom_call.1} parent=1 // pred_check_branch
      %1255 = sbr.rel (0) target = $region53
    $region52: #{tpu_custom_call.1} parent=1 // pred_region
      %s1257 = ssub.s32 768, 768
      %1258 = vsyncadd [#allocation4], %s1257
      %s1259 = sshll.u32 [#allocation11], 4
      %s1260 = int_to_ptr.vmem [resolvable:$true] %s1259
      %1265 = dma.vmem_to_hbm [thread:$0]  %s1260, 768, %s6, [#allocation4], 128, 128, 8
    $region53: #{tpu_custom_call.1} parent=1 // pred_fallthru
      _
    // Predicated region
    $region54: #{tpu_custom_call.1} parent=1 // pred_check
      _
    $region55: #{tpu_custom_call.1} parent=1 // pred_check_branch
      %1267 = sbr.rel (0) target = $region57
    $region56: #{tpu_custom_call.1} parent=1 // pred_region
      %s1269 = ssub.s32 32, 32
      %1270 = vsyncadd [#allocation13], %s1269
      %s1272 = sshll.u32 [#allocation12], 4
      %s1273 = int_to_ptr.vmem [resolvable:$true] %s1272
      %1275 = dma.vmem_to_hbm [thread:$0]  %s1273, 32, %s7, [#allocation13]
    $region57: #{tpu_custom_call.1} parent=1 // pred_fallthru
      _
    // Predicated region
    $region58: #{tpu_custom_call.1} parent=1 // pred_check
      _
    $region59: #{tpu_custom_call.1} parent=1 // pred_check_branch
      %1277 = sbr.rel (0) target = $region61
    $region60: #{tpu_custom_call.1} parent=1 // pred_region
      %1278 = dma.done [#allocation4], 768
    $region61: #{tpu_custom_call.1} parent=1 // pred_fallthru
      _
    // Predicated region
    $region62: #{tpu_custom_call.1} parent=1 // pred_check
      _
    $region63: #{tpu_custom_call.1} parent=1 // pred_check_branch
      %1280 = sbr.rel (0) target = $region65
    $region64: #{tpu_custom_call.1} parent=1 // pred_region
      %1281 = dma.done [#allocation13], 32
    $region65: #{tpu_custom_call.1} parent=1 // pred_fallthru
      _
    %1282 = vsyncpa [#allocation3], 1
    %1283 = vsyncpa [#allocation6], 1
    %1284 = vsyncpa [#allocation9], 1
    %1285 = vsyncpa [#allocation4], 1
    %1286 = vsyncpa [#allocation13], 1

</llo_original>
